<compile_context>
chip_gen: v7x
topology: tpu7x:2x2x1
jax: 0.10.0
libtpu: 0.0.40
codegen_flags: <defaults>
</compile_context>

<pallas_src>
import functools

import jax
import jax.numpy as jnp
from jax import lax
from jax.experimental import pallas as pl
from jax.experimental.pallas import tpu as pltpu


def _lstm128_kernel(x_ref, wih_ref, whh_ref, b_ref,
                    gamma_ref, beta_ref, fcw_ref, fcb_ref,
                    out_ref, gx_ref, *, T, BP):
    """x_ref: (T*BP, D) bf16 time-major flattened input. out_ref: (BP, CP) f32 logits.
    gx_ref: (T*BP, 4H) f32 VMEM scratch holding the hoisted input projection."""
    H = whh_ref.shape[0]

    # --- Batched input projection for ALL timesteps (off the serial chain). ---
    # Stored to VMEM scratch so it is not a live 32-vreg value across the loop.
    gx_ref[...] = jnp.dot(x_ref[...], wih_ref[...],
                          preferred_element_type=jnp.float32) + b_ref[...]

    h = jnp.zeros((BP, H), jnp.float32)
    c = jnp.zeros((BP, H), jnp.float32)

    # --- Recurrence, fully unrolled (T static). One MXU dot per step. ---
    for t in range(T):
        # Per-step gate slab re-loaded from scratch (a few vld, fully hidden);
        # whh_ref read inside the dot each step instead of a hoisted SSA value.
        gates = gx_ref[pl.ds(t * BP, BP), :] + jnp.dot(
            h.astype(jnp.bfloat16), whh_ref[...],
            preferred_element_type=jnp.float32)
        # PyTorch gate order: i, f, g, o.  H=128 -> lane-aligned 128-wide slices.
        i = jax.nn.sigmoid(gates[:, 0:H])
        f = jax.nn.sigmoid(gates[:, H:2 * H])
        g = jnp.tanh(gates[:, 2 * H:3 * H])
        o = jax.nn.sigmoid(gates[:, 3 * H:4 * H])
        c = f * c + i * g
        h = o * jnp.tanh(c)

    # --- LayerNorm on the final hidden state (torch default eps=1e-5). ---
    mean = jnp.mean(h, axis=-1, keepdims=True)
    var = jnp.mean(jnp.square(h - mean), axis=-1, keepdims=True)
    normed = (h - mean) * lax.rsqrt(var + 1e-5)
    normed = normed * gamma_ref[...] + beta_ref[...]

    # --- ReLU + FC (bf16 operands, f32 accumulate; lane-dense 128-wide store). ---
    act = jnp.maximum(normed, 0.0)
    out_ref[...] = jnp.dot(act.astype(jnp.bfloat16), fcw_ref[...],
                           preferred_element_type=jnp.float32) + fcb_ref[...]


def eye_state_lstm_128(x, params):
    """x: (B, T, D) float32  ->  (B, num_classes) float32."""
    B, T, D = x.shape
    H = params["whh"].shape[0]
    C = params["fcw"].shape[1]

    BP = max(16, -(-B // 16) * 16)         # pad batch to a full bf16 sublane pack
    CP = max(128, -(-C // 128) * 128)      # pad FC output to a full lane tile

    # Pad batch with zero rows, go time-major, flatten to (T*BP, D), cast to bf16
    # in the wrapper (halves the x DMA, removes an in-kernel VPU cast).
    x_pad = jnp.pad(x, ((0, BP - B), (0, 0), (0, 0)))
    x_flat = jnp.transpose(x_pad, (1, 0, 2)).reshape(T * BP, D).astype(jnp.bfloat16)

    fcw_pad = jnp.zeros((H, CP), jnp.bfloat16).at[:, :C].set(
        params["fcw"].astype(jnp.bfloat16))
    fcb_pad = jnp.zeros((1, CP), jnp.float32).at[:, :C].set(params["fcb"])

    args = (x_flat,
            params["wih"].astype(jnp.bfloat16),   # bf16 matmul operands,
            params["whh"].astype(jnp.bfloat16),   # f32 accumulation in-kernel
            params["b"],
            params["gamma"], params["beta"],
            fcw_pad, fcb_pad)

    # Advisory cost hint so XLA overlaps the (small, exposed) weight DMAs.
    flops = (2 * T * BP * D * 4 * H        # input projection
             + 2 * T * BP * H * 4 * H      # recurrence
             + 2 * BP * H * CP)            # FC
    transcendentals = T * BP * 5 * H       # 3 sigmoid + 2 tanh per step
    bytes_accessed = (sum(int(a.size) * a.dtype.itemsize for a in args)
                      + BP * CP * 4)

    vmem = pl.BlockSpec(memory_space=pltpu.MemorySpace.VMEM)
    out = pl.pallas_call(
        functools.partial(_lstm128_kernel, T=T, BP=BP),
        out_shape=jax.ShapeDtypeStruct((BP, CP), jnp.float32),
        in_specs=[vmem] * len(args),
        out_specs=vmem,
        scratch_shapes=[pltpu.VMEM((T * BP, 4 * H), jnp.float32)],
        cost_estimate=pl.CostEstimate(flops=flops,
                                      transcendentals=transcendentals,
                                      bytes_accessed=bytes_accessed),
    )(*args)
    return out[:B, :C]


def init_params(key, input_size, hidden_size, num_classes):
    """Deterministic synthetic params matching nn.LSTM / LayerNorm / Linear shapes."""
    H = hidden_size
    k = H ** -0.5
    keys = jax.random.split(key, 8)

    def u(k_, shape, scale):
        return jax.random.uniform(k_, shape, jnp.float32, -scale, scale)

    w_ih = u(keys[0], (4 * H, input_size), k)     # torch weight_ih_l0
    w_hh = u(keys[1], (4 * H, H), k)              # torch weight_hh_l0
    b_ih = u(keys[2], (4 * H,), k)
    b_hh = u(keys[3], (4 * H,), k)
    return {
        "wih": jnp.transpose(w_ih),               # (D, 4H)
        "whh": jnp.transpose(w_hh),               # (H, 4H)
        "b": (b_ih + b_hh)[None, :],              # (1, 4H) combined bias
        "gamma": jnp.ones((1, H), jnp.float32),   # LayerNorm weight
        "beta": jnp.zeros((1, H), jnp.float32),   # LayerNorm bias
        "fcw": jnp.transpose(u(keys[4], (num_classes, H), k)),  # (H, C)
        "fcb": u(keys[5], (1, num_classes), k),   # (1, C)
    }


if __name__ == "__main__":
    # Small shapes consistent with the module: D=16, hidden_size=128 (module name),
    # 2 classes, batch=2, seq=8.
    input_size, hidden_size, num_classes = 16, 128, 2
    B, T = 2, 8

    key = jax.random.PRNGKey(0)
    kx, kp = jax.random.split(key)
    x = jax.random.normal(kx, (B, T, input_size), jnp.float32)
    params = init_params(kp, input_size, hidden_size, num_classes)

    out = jax.jit(eye_state_lstm_128)(x, params)
    jax.block_until_ready(out)
    assert out.shape == (B, num_classes) and out.dtype == jnp.float32
    print("KERNEL_OK")
</pallas_src>

<mosaic_0001>
module attributes {stable_mosaic.version = 11 : i64} {
  func.func @_lstm128_kernel(%arg0: memref<128x16xbf16, #tpu.memory_space<vmem>>, %arg1: memref<16x512xbf16, #tpu.memory_space<vmem>>, %arg2: memref<128x512xbf16, #tpu.memory_space<vmem>>, %arg3: memref<1x512xf32, #tpu.memory_space<vmem>>, %arg4: memref<1x128xf32, #tpu.memory_space<vmem>>, %arg5: memref<1x128xf32, #tpu.memory_space<vmem>>, %arg6: memref<128x128xbf16, #tpu.memory_space<vmem>>, %arg7: memref<1x128xf32, #tpu.memory_space<vmem>>, %arg8: memref<16x128xf32, #tpu.memory_space<vmem>>, %arg9: memref<128x512xf32, #tpu.memory_space<vmem>>) attributes {dimension_semantics = [], scalar_prefetch = 0 : i64, scratch_operands = 1 : i64, tpu.core_type = #tpu.core_type<tc>} {
    %c0 = arith.constant 0 : index
    %c0_0 = arith.constant 0 : index
    %0 = vector.load %arg0[%c0, %c0_0] : memref<128x16xbf16, #tpu.memory_space<vmem>>, vector<128x16xbf16>
    %c0_1 = arith.constant 0 : index
    %c0_2 = arith.constant 0 : index
    %1 = vector.load %arg1[%c0_1, %c0_2] : memref<16x512xbf16, #tpu.memory_space<vmem>>, vector<16x512xbf16>
    %cst = arith.constant dense<0.000000e+00> : vector<128x512xf32>
    %2 = tpu.matmul %0, %1, %cst {dimension_numbers = #tpu.dot_dimension_numbers<[1], [0], [0], [1], [0, 0, 1, 1], [], []>} : vector<128x16xbf16>, vector<16x512xbf16>, vector<128x512xf32> -> vector<128x512xf32>
    %c0_3 = arith.constant 0 : index
    %c0_4 = arith.constant 0 : index
    %3 = vector.load %arg3[%c0_3, %c0_4] : memref<1x512xf32, #tpu.memory_space<vmem>>, vector<1x512xf32>
    %4 = vector.broadcast %3 : vector<1x512xf32> to vector<128x512xf32>
    %5 = arith.addf %2, %4 : vector<128x512xf32>
    %c0_5 = arith.constant 0 : index
    %c0_6 = arith.constant 0 : index
    %6 = vector.load %arg9[%c0_5, %c0_6] : memref<128x512xf32, #tpu.memory_space<vmem>>, vector<128x512xf32>
    tpu.vector_store %arg9[%c0_5, %c0_6], %5 {strides = array<i32>} : memref<128x512xf32, #tpu.memory_space<vmem>>, vector<128x512xf32>,
    %cst_7 = arith.constant 0.000000e+00 : f32
    %7 = vector.broadcast %cst_7 : f32 to vector<16x128xf32>
    %cst_8 = arith.constant 0.000000e+00 : f32
    %8 = vector.broadcast %cst_8 : f32 to vector<16x128xf32>
    %c0_9 = arith.constant 0 : index
    %c0_10 = arith.constant 0 : index
    %9 = vector.load %arg9[%c0_9, %c0_10] : memref<128x512xf32, #tpu.memory_space<vmem>>, vector<16x512xf32>
    %10 = arith.truncf %7 : vector<16x128xf32> to vector<16x128xbf16>
    %c0_11 = arith.constant 0 : index
    %c0_12 = arith.constant 0 : index
    %11 = vector.load %arg2[%c0_11, %c0_12] : memref<128x512xbf16, #tpu.memory_space<vmem>>, vector<128x512xbf16>
    %cst_13 = arith.constant dense<0.000000e+00> : vector<16x512xf32>
    %12 = tpu.matmul %10, %11, %cst_13 {dimension_numbers = #tpu.dot_dimension_numbers<[1], [0], [0], [1], [0, 0, 1, 1], [], []>} : vector<16x128xbf16>, vector<128x512xbf16>, vector<16x512xf32> -> vector<16x512xf32>
    %13 = arith.addf %9, %12 : vector<16x512xf32>
    %14 = vector.extract_strided_slice %13 {offsets = [0, 0], sizes = [16, 128], strides = [1, 1]} : vector<16x512xf32> to vector<16x128xf32>
    %15 = arith.negf %14 : vector<16x128xf32>
    %16 = math.exp %15 : vector<16x128xf32>
    %cst_14 = arith.constant 1.000000e+00 : f32
    %17 = vector.broadcast %cst_14 : f32 to vector<16x128xf32>
    %18 = arith.addf %17, %16 : vector<16x128xf32>
    %19 = arith.divf %17, %18 : vector<16x128xf32>
    %20 = vector.extract_strided_slice %13 {offsets = [0, 128], sizes = [16, 128], strides = [1, 1]} : vector<16x512xf32> to vector<16x128xf32>
    %21 = arith.negf %20 : vector<16x128xf32>
    %22 = math.exp %21 : vector<16x128xf32>
    %cst_15 = arith.constant 1.000000e+00 : f32
    %23 = vector.broadcast %cst_15 : f32 to vector<16x128xf32>
    %24 = arith.addf %23, %22 : vector<16x128xf32>
    %25 = arith.divf %23, %24 : vector<16x128xf32>
    %26 = vector.extract_strided_slice %13 {offsets = [0, 256], sizes = [16, 128], strides = [1, 1]} : vector<16x512xf32> to vector<16x128xf32>
    %27 = math.tanh %26 : vector<16x128xf32>
    %28 = vector.extract_strided_slice %13 {offsets = [0, 384], sizes = [16, 128], strides = [1, 1]} : vector<16x512xf32> to vector<16x128xf32>
    %29 = arith.negf %28 : vector<16x128xf32>
    %30 = math.exp %29 : vector<16x128xf32>
    %cst_16 = arith.constant 1.000000e+00 : f32
    %31 = vector.broadcast %cst_16 : f32 to vector<16x128xf32>
    %32 = arith.addf %31, %30 : vector<16x128xf32>
    %33 = arith.divf %31, %32 : vector<16x128xf32>
    %34 = arith.mulf %25, %8 : vector<16x128xf32>
    %35 = arith.mulf %19, %27 : vector<16x128xf32>
    %36 = arith.addf %34, %35 : vector<16x128xf32>
    %37 = math.tanh %36 : vector<16x128xf32>
    %38 = arith.mulf %33, %37 : vector<16x128xf32>
    %c16 = arith.constant 16 : index
    %c0_17 = arith.constant 0 : index
    %39 = vector.load %arg9[%c16, %c0_17] : memref<128x512xf32, #tpu.memory_space<vmem>>, vector<16x512xf32>
    %40 = arith.truncf %38 : vector<16x128xf32> to vector<16x128xbf16>
    %c0_18 = arith.constant 0 : index
    %c0_19 = arith.constant 0 : index
    %41 = vector.load %arg2[%c0_18, %c0_19] : memref<128x512xbf16, #tpu.memory_space<vmem>>, vector<128x512xbf16>
    %cst_20 = arith.constant dense<0.000000e+00> : vector<16x512xf32>
    %42 = tpu.matmul %40, %41, %cst_20 {dimension_numbers = #tpu.dot_dimension_numbers<[1], [0], [0], [1], [0, 0, 1, 1], [], []>} : vector<16x128xbf16>, vector<128x512xbf16>, vector<16x512xf32> -> vector<16x512xf32>
    %43 = arith.addf %39, %42 : vector<16x512xf32>
    %44 = vector.extract_strided_slice %43 {offsets = [0, 0], sizes = [16, 128], strides = [1, 1]} : vector<16x512xf32> to vector<16x128xf32>
    %45 = arith.negf %44 : vector<16x128xf32>
    %46 = math.exp %45 : vector<16x128xf32>
    %cst_21 = arith.constant 1.000000e+00 : f32
    %47 = vector.broadcast %cst_21 : f32 to vector<16x128xf32>
    %48 = arith.addf %47, %46 : vector<16x128xf32>
    %49 = arith.divf %47, %48 : vector<16x128xf32>
    %50 = vector.extract_strided_slice %43 {offsets = [0, 128], sizes = [16, 128], strides = [1, 1]} : vector<16x512xf32> to vector<16x128xf32>
    %51 = arith.negf %50 : vector<16x128xf32>
    %52 = math.exp %51 : vector<16x128xf32>
    %cst_22 = arith.constant 1.000000e+00 : f32
    %53 = vector.broadcast %cst_22 : f32 to vector<16x128xf32>
    %54 = arith.addf %53, %52 : vector<16x128xf32>
    %55 = arith.divf %53, %54 : vector<16x128xf32>
    %56 = vector.extract_strided_slice %43 {offsets = [0, 256], sizes = [16, 128], strides = [1, 1]} : vector<16x512xf32> to vector<16x128xf32>
    %57 = math.tanh %56 : vector<16x128xf32>
    %58 = vector.extract_strided_slice %43 {offsets = [0, 384], sizes = [16, 128], strides = [1, 1]} : vector<16x512xf32> to vector<16x128xf32>
    %59 = arith.negf %58 : vector<16x128xf32>
    %60 = math.exp %59 : vector<16x128xf32>
    %cst_23 = arith.constant 1.000000e+00 : f32
    %61 = vector.broadcast %cst_23 : f32 to vector<16x128xf32>
    %62 = arith.addf %61, %60 : vector<16x128xf32>
    %63 = arith.divf %61, %62 : vector<16x128xf32>
    %64 = arith.mulf %55, %36 : vector<16x128xf32>
    %65 = arith.mulf %49, %57 : vector<16x128xf32>
    %66 = arith.addf %64, %65 : vector<16x128xf32>
    %67 = math.tanh %66 : vector<16x128xf32>
    %68 = arith.mulf %63, %67 : vector<16x128xf32>
    %c32 = arith.constant 32 : index
    %c0_24 = arith.constant 0 : index
    %69 = vector.load %arg9[%c32, %c0_24] : memref<128x512xf32, #tpu.memory_space<vmem>>, vector<16x512xf32>
    %70 = arith.truncf %68 : vector<16x128xf32> to vector<16x128xbf16>
    %c0_25 = arith.constant 0 : index
    %c0_26 = arith.constant 0 : index
    %71 = vector.load %arg2[%c0_25, %c0_26] : memref<128x512xbf16, #tpu.memory_space<vmem>>, vector<128x512xbf16>
    %cst_27 = arith.constant dense<0.000000e+00> : vector<16x512xf32>
    %72 = tpu.matmul %70, %71, %cst_27 {dimension_numbers = #tpu.dot_dimension_numbers<[1], [0], [0], [1], [0, 0, 1, 1], [], []>} : vector<16x128xbf16>, vector<128x512xbf16>, vector<16x512xf32> -> vector<16x512xf32>
    %73 = arith.addf %69, %72 : vector<16x512xf32>
    %74 = vector.extract_strided_slice %73 {offsets = [0, 0], sizes = [16, 128], strides = [1, 1]} : vector<16x512xf32> to vector<16x128xf32>
    %75 = arith.negf %74 : vector<16x128xf32>
    %76 = math.exp %75 : vector<16x128xf32>
    %cst_28 = arith.constant 1.000000e+00 : f32
    %77 = vector.broadcast %cst_28 : f32 to vector<16x128xf32>
    %78 = arith.addf %77, %76 : vector<16x128xf32>
    %79 = arith.divf %77, %78 : vector<16x128xf32>
    %80 = vector.extract_strided_slice %73 {offsets = [0, 128], sizes = [16, 128], strides = [1, 1]} : vector<16x512xf32> to vector<16x128xf32>
    %81 = arith.negf %80 : vector<16x128xf32>
    %82 = math.exp %81 : vector<16x128xf32>
    %cst_29 = arith.constant 1.000000e+00 : f32
    %83 = vector.broadcast %cst_29 : f32 to vector<16x128xf32>
    %84 = arith.addf %83, %82 : vector<16x128xf32>
    %85 = arith.divf %83, %84 : vector<16x128xf32>
    %86 = vector.extract_strided_slice %73 {offsets = [0, 256], sizes = [16, 128], strides = [1, 1]} : vector<16x512xf32> to vector<16x128xf32>
    %87 = math.tanh %86 : vector<16x128xf32>
    %88 = vector.extract_strided_slice %73 {offsets = [0, 384], sizes = [16, 128], strides = [1, 1]} : vector<16x512xf32> to vector<16x128xf32>
    %89 = arith.negf %88 : vector<16x128xf32>
    %90 = math.exp %89 : vector<16x128xf32>
    %cst_30 = arith.constant 1.000000e+00 : f32
    %91 = vector.broadcast %cst_30 : f32 to vector<16x128xf32>
    %92 = arith.addf %91, %90 : vector<16x128xf32>
    %93 = arith.divf %91, %92 : vector<16x128xf32>
    %94 = arith.mulf %85, %66 : vector<16x128xf32>
    %95 = arith.mulf %79, %87 : vector<16x128xf32>
    %96 = arith.addf %94, %95 : vector<16x128xf32>
    %97 = math.tanh %96 : vector<16x128xf32>
    %98 = arith.mulf %93, %97 : vector<16x128xf32>
    %c48 = arith.constant 48 : index
    %c0_31 = arith.constant 0 : index
    %99 = vector.load %arg9[%c48, %c0_31] : memref<128x512xf32, #tpu.memory_space<vmem>>, vector<16x512xf32>
    %100 = arith.truncf %98 : vector<16x128xf32> to vector<16x128xbf16>
    %c0_32 = arith.constant 0 : index
    %c0_33 = arith.constant 0 : index
    %101 = vector.load %arg2[%c0_32, %c0_33] : memref<128x512xbf16, #tpu.memory_space<vmem>>, vector<128x512xbf16>
    %cst_34 = arith.constant dense<0.000000e+00> : vector<16x512xf32>
    %102 = tpu.matmul %100, %101, %cst_34 {dimension_numbers = #tpu.dot_dimension_numbers<[1], [0], [0], [1], [0, 0, 1, 1], [], []>} : vector<16x128xbf16>, vector<128x512xbf16>, vector<16x512xf32> -> vector<16x512xf32>
    %103 = arith.addf %99, %102 : vector<16x512xf32>
    %104 = vector.extract_strided_slice %103 {offsets = [0, 0], sizes = [16, 128], strides = [1, 1]} : vector<16x512xf32> to vector<16x128xf32>
    %105 = arith.negf %104 : vector<16x128xf32>
    %106 = math.exp %105 : vector<16x128xf32>
    %cst_35 = arith.constant 1.000000e+00 : f32
    %107 = vector.broadcast %cst_35 : f32 to vector<16x128xf32>
    %108 = arith.addf %107, %106 : vector<16x128xf32>
    %109 = arith.divf %107, %108 : vector<16x128xf32>
    %110 = vector.extract_strided_slice %103 {offsets = [0, 128], sizes = [16, 128], strides = [1, 1]} : vector<16x512xf32> to vector<16x128xf32>
    %111 = arith.negf %110 : vector<16x128xf32>
    %112 = math.exp %111 : vector<16x128xf32>
    %cst_36 = arith.constant 1.000000e+00 : f32
    %113 = vector.broadcast %cst_36 : f32 to vector<16x128xf32>
    %114 = arith.addf %113, %112 : vector<16x128xf32>
    %115 = arith.divf %113, %114 : vector<16x128xf32>
    %116 = vector.extract_strided_slice %103 {offsets = [0, 256], sizes = [16, 128], strides = [1, 1]} : vector<16x512xf32> to vector<16x128xf32>
    %117 = math.tanh %116 : vector<16x128xf32>
    %118 = vector.extract_strided_slice %103 {offsets = [0, 384], sizes = [16, 128], strides = [1, 1]} : vector<16x512xf32> to vector<16x128xf32>
    %119 = arith.negf %118 : vector<16x128xf32>
    %120 = math.exp %119 : vector<16x128xf32>
    %cst_37 = arith.constant 1.000000e+00 : f32
    %121 = vector.broadcast %cst_37 : f32 to vector<16x128xf32>
    %122 = arith.addf %121, %120 : vector<16x128xf32>
    %123 = arith.divf %121, %122 : vector<16x128xf32>
    %124 = arith.mulf %115, %96 : vector<16x128xf32>
    %125 = arith.mulf %109, %117 : vector<16x128xf32>
    %126 = arith.addf %124, %125 : vector<16x128xf32>
    %127 = math.tanh %126 : vector<16x128xf32>
    %128 = arith.mulf %123, %127 : vector<16x128xf32>
    %c64 = arith.constant 64 : index
    %c0_38 = arith.constant 0 : index
    %129 = vector.load %arg9[%c64, %c0_38] : memref<128x512xf32, #tpu.memory_space<vmem>>, vector<16x512xf32>
    %130 = arith.truncf %128 : vector<16x128xf32> to vector<16x128xbf16>
    %c0_39 = arith.constant 0 : index
    %c0_40 = arith.constant 0 : index
    %131 = vector.load %arg2[%c0_39, %c0_40] : memref<128x512xbf16, #tpu.memory_space<vmem>>, vector<128x512xbf16>
    %cst_41 = arith.constant dense<0.000000e+00> : vector<16x512xf32>
    %132 = tpu.matmul %130, %131, %cst_41 {dimension_numbers = #tpu.dot_dimension_numbers<[1], [0], [0], [1], [0, 0, 1, 1], [], []>} : vector<16x128xbf16>, vector<128x512xbf16>, vector<16x512xf32> -> vector<16x512xf32>
    %133 = arith.addf %129, %132 : vector<16x512xf32>
    %134 = vector.extract_strided_slice %133 {offsets = [0, 0], sizes = [16, 128], strides = [1, 1]} : vector<16x512xf32> to vector<16x128xf32>
    %135 = arith.negf %134 : vector<16x128xf32>
    %136 = math.exp %135 : vector<16x128xf32>
    %cst_42 = arith.constant 1.000000e+00 : f32
    %137 = vector.broadcast %cst_42 : f32 to vector<16x128xf32>
    %138 = arith.addf %137, %136 : vector<16x128xf32>
    %139 = arith.divf %137, %138 : vector<16x128xf32>
    %140 = vector.extract_strided_slice %133 {offsets = [0, 128], sizes = [16, 128], strides = [1, 1]} : vector<16x512xf32> to vector<16x128xf32>
    %141 = arith.negf %140 : vector<16x128xf32>
    %142 = math.exp %141 : vector<16x128xf32>
    %cst_43 = arith.constant 1.000000e+00 : f32
    %143 = vector.broadcast %cst_43 : f32 to vector<16x128xf32>
    %144 = arith.addf %143, %142 : vector<16x128xf32>
    %145 = arith.divf %143, %144 : vector<16x128xf32>
    %146 = vector.extract_strided_slice %133 {offsets = [0, 256], sizes = [16, 128], strides = [1, 1]} : vector<16x512xf32> to vector<16x128xf32>
    %147 = math.tanh %146 : vector<16x128xf32>
    %148 = vector.extract_strided_slice %133 {offsets = [0, 384], sizes = [16, 128], strides = [1, 1]} : vector<16x512xf32> to vector<16x128xf32>
    %149 = arith.negf %148 : vector<16x128xf32>
    %150 = math.exp %149 : vector<16x128xf32>
    %cst_44 = arith.constant 1.000000e+00 : f32
    %151 = vector.broadcast %cst_44 : f32 to vector<16x128xf32>
    %152 = arith.addf %151, %150 : vector<16x128xf32>
    %153 = arith.divf %151, %152 : vector<16x128xf32>
    %154 = arith.mulf %145, %126 : vector<16x128xf32>
    %155 = arith.mulf %139, %147 : vector<16x128xf32>
    %156 = arith.addf %154, %155 : vector<16x128xf32>
    %157 = math.tanh %156 : vector<16x128xf32>
    %158 = arith.mulf %153, %157 : vector<16x128xf32>
    %c80 = arith.constant 80 : index
    %c0_45 = arith.constant 0 : index
    %159 = vector.load %arg9[%c80, %c0_45] : memref<128x512xf32, #tpu.memory_space<vmem>>, vector<16x512xf32>
    %160 = arith.truncf %158 : vector<16x128xf32> to vector<16x128xbf16>
    %c0_46 = arith.constant 0 : index
    %c0_47 = arith.constant 0 : index
    %161 = vector.load %arg2[%c0_46, %c0_47] : memref<128x512xbf16, #tpu.memory_space<vmem>>, vector<128x512xbf16>
    %cst_48 = arith.constant dense<0.000000e+00> : vector<16x512xf32>
    %162 = tpu.matmul %160, %161, %cst_48 {dimension_numbers = #tpu.dot_dimension_numbers<[1], [0], [0], [1], [0, 0, 1, 1], [], []>} : vector<16x128xbf16>, vector<128x512xbf16>, vector<16x512xf32> -> vector<16x512xf32>
    %163 = arith.addf %159, %162 : vector<16x512xf32>
    %164 = vector.extract_strided_slice %163 {offsets = [0, 0], sizes = [16, 128], strides = [1, 1]} : vector<16x512xf32> to vector<16x128xf32>
    %165 = arith.negf %164 : vector<16x128xf32>
    %166 = math.exp %165 : vector<16x128xf32>
    %cst_49 = arith.constant 1.000000e+00 : f32
    %167 = vector.broadcast %cst_49 : f32 to vector<16x128xf32>
    %168 = arith.addf %167, %166 : vector<16x128xf32>
    %169 = arith.divf %167, %168 : vector<16x128xf32>
    %170 = vector.extract_strided_slice %163 {offsets = [0, 128], sizes = [16, 128], strides = [1, 1]} : vector<16x512xf32> to vector<16x128xf32>
    %171 = arith.negf %170 : vector<16x128xf32>
    %172 = math.exp %171 : vector<16x128xf32>
    %cst_50 = arith.constant 1.000000e+00 : f32
    %173 = vector.broadcast %cst_50 : f32 to vector<16x128xf32>
    %174 = arith.addf %173, %172 : vector<16x128xf32>
    %175 = arith.divf %173, %174 : vector<16x128xf32>
    %176 = vector.extract_strided_slice %163 {offsets = [0, 256], sizes = [16, 128], strides = [1, 1]} : vector<16x512xf32> to vector<16x128xf32>
    %177 = math.tanh %176 : vector<16x128xf32>
    %178 = vector.extract_strided_slice %163 {offsets = [0, 384], sizes = [16, 128], strides = [1, 1]} : vector<16x512xf32> to vector<16x128xf32>
    %179 = arith.negf %178 : vector<16x128xf32>
    %180 = math.exp %179 : vector<16x128xf32>
    %cst_51 = arith.constant 1.000000e+00 : f32
    %181 = vector.broadcast %cst_51 : f32 to vector<16x128xf32>
    %182 = arith.addf %181, %180 : vector<16x128xf32>
    %183 = arith.divf %181, %182 : vector<16x128xf32>
    %184 = arith.mulf %175, %156 : vector<16x128xf32>
    %185 = arith.mulf %169, %177 : vector<16x128xf32>
    %186 = arith.addf %184, %185 : vector<16x128xf32>
    %187 = math.tanh %186 : vector<16x128xf32>
    %188 = arith.mulf %183, %187 : vector<16x128xf32>
    %c96 = arith.constant 96 : index
    %c0_52 = arith.constant 0 : index
    %189 = vector.load %arg9[%c96, %c0_52] : memref<128x512xf32, #tpu.memory_space<vmem>>, vector<16x512xf32>
    %190 = arith.truncf %188 : vector<16x128xf32> to vector<16x128xbf16>
    %c0_53 = arith.constant 0 : index
    %c0_54 = arith.constant 0 : index
    %191 = vector.load %arg2[%c0_53, %c0_54] : memref<128x512xbf16, #tpu.memory_space<vmem>>, vector<128x512xbf16>
    %cst_55 = arith.constant dense<0.000000e+00> : vector<16x512xf32>
    %192 = tpu.matmul %190, %191, %cst_55 {dimension_numbers = #tpu.dot_dimension_numbers<[1], [0], [0], [1], [0, 0, 1, 1], [], []>} : vector<16x128xbf16>, vector<128x512xbf16>, vector<16x512xf32> -> vector<16x512xf32>
    %193 = arith.addf %189, %192 : vector<16x512xf32>
    %194 = vector.extract_strided_slice %193 {offsets = [0, 0], sizes = [16, 128], strides = [1, 1]} : vector<16x512xf32> to vector<16x128xf32>
    %195 = arith.negf %194 : vector<16x128xf32>
    %196 = math.exp %195 : vector<16x128xf32>
    %cst_56 = arith.constant 1.000000e+00 : f32
    %197 = vector.broadcast %cst_56 : f32 to vector<16x128xf32>
    %198 = arith.addf %197, %196 : vector<16x128xf32>
    %199 = arith.divf %197, %198 : vector<16x128xf32>
    %200 = vector.extract_strided_slice %193 {offsets = [0, 128], sizes = [16, 128], strides = [1, 1]} : vector<16x512xf32> to vector<16x128xf32>
    %201 = arith.negf %200 : vector<16x128xf32>
    %202 = math.exp %201 : vector<16x128xf32>
    %cst_57 = arith.constant 1.000000e+00 : f32
    %203 = vector.broadcast %cst_57 : f32 to vector<16x128xf32>
    %204 = arith.addf %203, %202 : vector<16x128xf32>
    %205 = arith.divf %203, %204 : vector<16x128xf32>
    %206 = vector.extract_strided_slice %193 {offsets = [0, 256], sizes = [16, 128], strides = [1, 1]} : vector<16x512xf32> to vector<16x128xf32>
    %207 = math.tanh %206 : vector<16x128xf32>
    %208 = vector.extract_strided_slice %193 {offsets = [0, 384], sizes = [16, 128], strides = [1, 1]} : vector<16x512xf32> to vector<16x128xf32>
    %209 = arith.negf %208 : vector<16x128xf32>
    %210 = math.exp %209 : vector<16x128xf32>
    %cst_58 = arith.constant 1.000000e+00 : f32
    %211 = vector.broadcast %cst_58 : f32 to vector<16x128xf32>
    %212 = arith.addf %211, %210 : vector<16x128xf32>
    %213 = arith.divf %211, %212 : vector<16x128xf32>
    %214 = arith.mulf %205, %186 : vector<16x128xf32>
    %215 = arith.mulf %199, %207 : vector<16x128xf32>
    %216 = arith.addf %214, %215 : vector<16x128xf32>
    %217 = math.tanh %216 : vector<16x128xf32>
    %218 = arith.mulf %213, %217 : vector<16x128xf32>
    %c112 = arith.constant 112 : index
    %c0_59 = arith.constant 0 : index
    %219 = vector.load %arg9[%c112, %c0_59] : memref<128x512xf32, #tpu.memory_space<vmem>>, vector<16x512xf32>
    %220 = arith.truncf %218 : vector<16x128xf32> to vector<16x128xbf16>
    %c0_60 = arith.constant 0 : index
    %c0_61 = arith.constant 0 : index
    %221 = vector.load %arg2[%c0_60, %c0_61] : memref<128x512xbf16, #tpu.memory_space<vmem>>, vector<128x512xbf16>
    %cst_62 = arith.constant dense<0.000000e+00> : vector<16x512xf32>
    %222 = tpu.matmul %220, %221, %cst_62 {dimension_numbers = #tpu.dot_dimension_numbers<[1], [0], [0], [1], [0, 0, 1, 1], [], []>} : vector<16x128xbf16>, vector<128x512xbf16>, vector<16x512xf32> -> vector<16x512xf32>
    %223 = arith.addf %219, %222 : vector<16x512xf32>
    %224 = vector.extract_strided_slice %223 {offsets = [0, 0], sizes = [16, 128], strides = [1, 1]} : vector<16x512xf32> to vector<16x128xf32>
    %225 = arith.negf %224 : vector<16x128xf32>
    %226 = math.exp %225 : vector<16x128xf32>
    %cst_63 = arith.constant 1.000000e+00 : f32
    %227 = vector.broadcast %cst_63 : f32 to vector<16x128xf32>
    %228 = arith.addf %227, %226 : vector<16x128xf32>
    %229 = arith.divf %227, %228 : vector<16x128xf32>
    %230 = vector.extract_strided_slice %223 {offsets = [0, 128], sizes = [16, 128], strides = [1, 1]} : vector<16x512xf32> to vector<16x128xf32>
    %231 = arith.negf %230 : vector<16x128xf32>
    %232 = math.exp %231 : vector<16x128xf32>
    %cst_64 = arith.constant 1.000000e+00 : f32
    %233 = vector.broadcast %cst_64 : f32 to vector<16x128xf32>
    %234 = arith.addf %233, %232 : vector<16x128xf32>
    %235 = arith.divf %233, %234 : vector<16x128xf32>
    %236 = vector.extract_strided_slice %223 {offsets = [0, 256], sizes = [16, 128], strides = [1, 1]} : vector<16x512xf32> to vector<16x128xf32>
    %237 = math.tanh %236 : vector<16x128xf32>
    %238 = vector.extract_strided_slice %223 {offsets = [0, 384], sizes = [16, 128], strides = [1, 1]} : vector<16x512xf32> to vector<16x128xf32>
    %239 = arith.negf %238 : vector<16x128xf32>
    %240 = math.exp %239 : vector<16x128xf32>
    %cst_65 = arith.constant 1.000000e+00 : f32
    %241 = vector.broadcast %cst_65 : f32 to vector<16x128xf32>
    %242 = arith.addf %241, %240 : vector<16x128xf32>
    %243 = arith.divf %241, %242 : vector<16x128xf32>
    %244 = arith.mulf %235, %216 : vector<16x128xf32>
    %245 = arith.mulf %229, %237 : vector<16x128xf32>
    %246 = arith.addf %244, %245 : vector<16x128xf32>
    %247 = math.tanh %246 : vector<16x128xf32>
    %248 = arith.mulf %243, %247 : vector<16x128xf32>
    %cst_66 = arith.constant dense<0.000000e+00> : vector<16xf32>
    %249 = vector.multi_reduction <add>, %248, %cst_66 [1] : vector<16x128xf32> to vector<16xf32>
    %250 = vector.shape_cast %249 : vector<16xf32> to vector<16x1xf32>
    %cst_67 = arith.constant 1.280000e+02 : f32
    %251 = vector.broadcast %cst_67 : f32 to vector<16x1xf32>
    %252 = arith.divf %250, %251 : vector<16x1xf32>
    %253 = vector.broadcast %252 : vector<16x1xf32> to vector<16x128xf32>
    %254 = arith.subf %248, %253 : vector<16x128xf32>
    %255 = arith.mulf %254, %254 : vector<16x128xf32>
    %cst_68 = arith.constant dense<0.000000e+00> : vector<16xf32>
    %256 = vector.multi_reduction <add>, %255, %cst_68 [1] : vector<16x128xf32> to vector<16xf32>
    %257 = vector.shape_cast %256 : vector<16xf32> to vector<16x1xf32>
    %cst_69 = arith.constant 1.280000e+02 : f32
    %258 = vector.broadcast %cst_69 : f32 to vector<16x1xf32>
    %259 = arith.divf %257, %258 : vector<16x1xf32>
    %260 = vector.broadcast %252 : vector<16x1xf32> to vector<16x128xf32>
    %261 = arith.subf %248, %260 : vector<16x128xf32>
    %cst_70 = arith.constant 9.99999974E-6 : f32
    %262 = vector.broadcast %cst_70 : f32 to vector<16x1xf32>
    %263 = arith.addf %259, %262 : vector<16x1xf32>
    %264 = math.rsqrt %263 : vector<16x1xf32>
    %265 = vector.broadcast %264 : vector<16x1xf32> to vector<16x128xf32>
    %266 = arith.mulf %261, %265 : vector<16x128xf32>
    %c0_71 = arith.constant 0 : index
    %c0_72 = arith.constant 0 : index
    %267 = vector.load %arg4[%c0_71, %c0_72] : memref<1x128xf32, #tpu.memory_space<vmem>>, vector<1x128xf32>
    %268 = vector.broadcast %267 : vector<1x128xf32> to vector<16x128xf32>
    %269 = arith.mulf %266, %268 : vector<16x128xf32>
    %c0_73 = arith.constant 0 : index
    %c0_74 = arith.constant 0 : index
    %270 = vector.load %arg5[%c0_73, %c0_74] : memref<1x128xf32, #tpu.memory_space<vmem>>, vector<1x128xf32>
    %271 = vector.broadcast %270 : vector<1x128xf32> to vector<16x128xf32>
    %272 = arith.addf %269, %271 : vector<16x128xf32>
    %cst_75 = arith.constant 0.000000e+00 : f32
    %273 = vector.broadcast %cst_75 : f32 to vector<16x128xf32>
    %274 = arith.maximumf %272, %273 : vector<16x128xf32>
    %275 = arith.truncf %274 : vector<16x128xf32> to vector<16x128xbf16>
    %c0_76 = arith.constant 0 : index
    %c0_77 = arith.constant 0 : index
    %276 = vector.load %arg6[%c0_76, %c0_77] : memref<128x128xbf16, #tpu.memory_space<vmem>>, vector<128x128xbf16>
    %cst_78 = arith.constant dense<0.000000e+00> : vector<16x128xf32>
    %277 = tpu.matmul %275, %276, %cst_78 {dimension_numbers = #tpu.dot_dimension_numbers<[1], [0], [0], [1], [0, 0, 1, 1], [], []>} : vector<16x128xbf16>, vector<128x128xbf16>, vector<16x128xf32> -> vector<16x128xf32>
    %c0_79 = arith.constant 0 : index
    %c0_80 = arith.constant 0 : index
    %278 = vector.load %arg7[%c0_79, %c0_80] : memref<1x128xf32, #tpu.memory_space<vmem>>, vector<1x128xf32>
    %279 = vector.broadcast %278 : vector<1x128xf32> to vector<16x128xf32>
    %280 = arith.addf %277, %279 : vector<16x128xf32>
    %c0_81 = arith.constant 0 : index
    %c0_82 = arith.constant 0 : index
    %281 = vector.load %arg8[%c0_81, %c0_82] : memref<16x128xf32, #tpu.memory_space<vmem>>, vector<16x128xf32>
    tpu.vector_store %arg8[%c0_81, %c0_82], %280 {strides = array<i32>} : memref<16x128xf32, #tpu.memory_space<vmem>>, vector<16x128xf32>,
    return
  }
}

</mosaic_0001>

<llo_original>
// kernel: eye_state_lstm_128.1
$region0: #{eye_state_lstm_128.1}
  #allocation0 [shape = 'u32[]', space=smem, size = 0x4, offset = 0x4, fixed_abs, tag = 'smem constant byte address 0x4 - core index']
  #allocation1 [shape = 'u32[144,128]{1,0:T(1,128)}', space=vmem, size = 0x12000, scoped, tag = 'internal scratch']
  #allocation2 [shape = 'f32[128,512]{1,0:T(8,128)}', space=vmem, size = 0x40000, scoped, tag = 'scratch operand']
  %s0 = inlined_call_operand.vmem [shape: bf16[128,16], index: 0, kind: input, shape index: {}]
  %s1 = inlined_call_operand.vmem [shape: bf16[16,512], index: 1, kind: input, shape index: {}]
  %s2 = inlined_call_operand.vmem [shape: bf16[128,512], index: 2, kind: input, shape index: {}]
  %s3 = inlined_call_operand.vmem [shape: f32[1,512], index: 3, kind: input, shape index: {}]
  %s4 = inlined_call_operand.vmem [shape: f32[1,128], index: 4, kind: input, shape index: {}]
  %s5 = inlined_call_operand.vmem [shape: f32[1,128], index: 5, kind: input, shape index: {}]
  %s6 = inlined_call_operand.vmem [shape: bf16[128,128], index: 6, kind: input, shape index: {}]
  %s7 = inlined_call_operand.vmem [shape: f32[1,128], index: 7, kind: input, shape index: {}]
  %s8 = inlined_call_operand.vmem [shape: f32[16,128], index: 8, kind: output, shape index: {}]
  %s9 = sld [smem:[#allocation0]]
  $region42: #{eye_state_lstm_128.1} parent=0
    _
  %s11 = ssub.s32 1, %s9
  %s12 = scalar_select 0, %s11, %s9
  // Predicated region
  $region2: #{eye_state_lstm_128.1} parent=0 // pred_check
    _
  $region3: #{eye_state_lstm_128.1} parent=0 // pred_check_branch
    %14 = sbr.rel (0) target = $region5
  $region4: #{eye_state_lstm_128.1} parent=0 // pred_region
    _
  $region5: #{eye_state_lstm_128.1} parent=0 // pred_fallthru
    _
  // Predicated region
  $region6: #{eye_state_lstm_128.1} parent=0 // pred_check
    _
  $region7: #{eye_state_lstm_128.1} parent=0 // pred_check_branch
    %16 = sbr.rel (0) target = $region9
  $region8: #{eye_state_lstm_128.1} parent=0 // pred_region
    _
  $region9: #{eye_state_lstm_128.1} parent=0 // pred_fallthru
    _
  // Predicated region
  $region10: #{eye_state_lstm_128.1} parent=0 // pred_check
    _
  $region11: #{eye_state_lstm_128.1} parent=0 // pred_check_branch
    %18 = sbr.rel (0) target = $region13
  $region12: #{eye_state_lstm_128.1} parent=0 // pred_region
    _
  $region13: #{eye_state_lstm_128.1} parent=0 // pred_fallthru
    _
  // Predicated region
  $region14: #{eye_state_lstm_128.1} parent=0 // pred_check
    _
  $region15: #{eye_state_lstm_128.1} parent=0 // pred_check_branch
    %20 = sbr.rel (0) target = $region17
  $region16: #{eye_state_lstm_128.1} parent=0 // pred_region
    _
  $region17: #{eye_state_lstm_128.1} parent=0 // pred_fallthru
    _
  // Predicated region
  $region18: #{eye_state_lstm_128.1} parent=0 // pred_check
    _
  $region19: #{eye_state_lstm_128.1} parent=0 // pred_check_branch
    %22 = sbr.rel (0) target = $region21
  $region20: #{eye_state_lstm_128.1} parent=0 // pred_region
    _
  $region21: #{eye_state_lstm_128.1} parent=0 // pred_fallthru
    _
  // Predicated region
  $region22: #{eye_state_lstm_128.1} parent=0 // pred_check
    _
  $region23: #{eye_state_lstm_128.1} parent=0 // pred_check_branch
    %24 = sbr.rel (0) target = $region25
  $region24: #{eye_state_lstm_128.1} parent=0 // pred_region
    _
  $region25: #{eye_state_lstm_128.1} parent=0 // pred_fallthru
    _
  // Predicated region
  $region26: #{eye_state_lstm_128.1} parent=0 // pred_check
    _
  $region27: #{eye_state_lstm_128.1} parent=0 // pred_check_branch
    %26 = sbr.rel (0) target = $region29
  $region28: #{eye_state_lstm_128.1} parent=0 // pred_region
    _
  $region29: #{eye_state_lstm_128.1} parent=0 // pred_fallthru
    _
  // Predicated region
  $region30: #{eye_state_lstm_128.1} parent=0 // pred_check
    _
  $region31: #{eye_state_lstm_128.1} parent=0 // pred_check_branch
    %28 = sbr.rel (0) target = $region33
  $region32: #{eye_state_lstm_128.1} parent=0 // pred_region
    _
  $region33: #{eye_state_lstm_128.1} parent=0 // pred_fallthru
    _
  %v30 = vld [vmem:[%s0] sm:$0xf]
  %v31 = vld [vmem:[%s0 + $0x4] sm:$0xf]
  %v32 = vld [vmem:[%s0 + $0x8] sm:$0xf]
  %v33 = vld [vmem:[%s0 + $0xc] sm:$0xf]
  %v34 = vld [vmem:[%s0 + $0x10] sm:$0xf]
  %v35 = vld [vmem:[%s0 + $0x14] sm:$0xf]
  %v36 = vld [vmem:[%s0 + $0x18] sm:$0xf]
  %v37 = vld [vmem:[%s0 + $0x1c] sm:$0xf]
  %v38 = vld [vmem:[%s0 + $0x20] sm:$0xf]
  %v39 = vld [vmem:[%s0 + $0x24] sm:$0xf]
  %v40 = vld [vmem:[%s0 + $0x28] sm:$0xf]
  %v41 = vld [vmem:[%s0 + $0x2c] sm:$0xf]
  %v42 = vld [vmem:[%s0 + $0x30] sm:$0xf]
  %v43 = vld [vmem:[%s0 + $0x34] sm:$0xf]
  %v44 = vld [vmem:[%s0 + $0x38] sm:$0xf]
  %v45 = vld [vmem:[%s0 + $0x3c] sm:$0xf]
  %v46 = vld [vmem:[%s1] sm:$0xff]
  %v47 = vld [vmem:[%s1 + $0x8] sm:$0xff]
  %v48 = vld [vmem:[%s1 + $0x10] sm:$0xff]
  %v49 = vld [vmem:[%s1 + $0x18] sm:$0xff]
  %v50 = vld [vmem:[%s3] sm:$0xf]
  %v52 = vlaneseq
  %v53 = vshrl.u32 %v52, 7
  %v54 = vsub.s32 0, %v53
  %v55 = vrot.slane %v50, %v54
  %v56 = vlaneseq
  %v57 = vshrl.u32 %v56, 7
  %v58 = vsub.s32 1, %v57
  %v59 = vrot.slane %v50, %v58
  %v60 = vlaneseq
  %v61 = vshrl.u32 %v60, 7
  %v62 = vsub.s32 2, %v61
  %v63 = vrot.slane %v50, %v62
  %v64 = vlaneseq
  %v65 = vshrl.u32 %v64, 7
  %v66 = vsub.s32 3, %v65
  %v67 = vrot.slane %v50, %v66
  %v88 = vunpack.c.l.b16 %v30
  %v89 = vunpack.c.l.b16 %v31
  %v90 = vunpack.c.l.b16 %v32
  %v91 = vunpack.c.l.b16 %v33
  %v92 = vunpack.c.l.b16 %v34
  %v93 = vunpack.c.l.b16 %v35
  %v94 = vunpack.c.l.b16 %v36
  %v95 = vunpack.c.l.b16 %v37
  %v96 = vunpack.c.l.b16 %v38
  %v97 = vunpack.c.l.b16 %v39
  %v98 = vunpack.c.l.b16 %v40
  %v99 = vunpack.c.l.b16 %v41
  %v100 = vunpack.c.l.b16 %v42
  %v101 = vunpack.c.l.b16 %v43
  %v102 = vunpack.c.l.b16 %v44
  %v103 = vunpack.c.l.b16 %v45
  %v104 = vpack.c.b16 %v89, %v88
  %v105 = vpack.c.b16 %v91, %v90
  %v106 = vpack.c.b16 %v93, %v92
  %v107 = vpack.c.b16 %v95, %v94
  %v108 = vpack.c.b16 %v97, %v96
  %v109 = vpack.c.b16 %v99, %v98
  %v110 = vpack.c.b16 %v101, %v100
  %v111 = vpack.c.b16 %v103, %v102
  %v116 = vunpack.c.l.b16 %v46
  %v117 = vunpack.c.h.b16 %v46
  %v118 = vunpack.c.l.b16 %v47
  %v119 = vunpack.c.h.b16 %v47
  %v120 = vunpack.c.l.b16 %v48
  %v121 = vunpack.c.h.b16 %v48
  %v122 = vunpack.c.l.b16 %v49
  %v123 = vunpack.c.h.b16 %v49
  %v124 = vpack.c.b16 %v120, %v116
  %v125 = vpack.c.b16 %v121, %v117
  %v126 = vpack.c.b16 %v122, %v118
  %v127 = vpack.c.b16 %v123, %v119
  %vm132 = vcmask 130048
  %v134 = vsel %vm132, %v104, 0
  %v137 = vsel %vm132, %v105, 0
  %v140 = vsel %vm132, %v106, 0
  %v143 = vsel %vm132, %v107, 0
  %v146 = vsel %vm132, %v108, 0
  %v149 = vsel %vm132, %v109, 0
  %v152 = vsel %vm132, %v110, 0
  %v155 = vsel %vm132, %v111, 0
  %157 = vmatprep.subr.bf16.mxu0 %v125
  %158 = vmatpush1.bf16.msra.mxu0 %v124
  %159 = vmatprep.subr.bf16.mxu0 0
  %160 = vmatpush1.bf16.msra.mxu0 0
  %161 = vmatprep.subr.bf16.mxu0 0
  %162 = vmatpush1.bf16.msra.mxu0 0
  %163 = vmatprep.subr.bf16.mxu0 0
  %164 = vmatpush1.bf16.msra.mxu0 0
  %165 = vmatprep.subr.bf16.mxu0 0
  %166 = vmatpush1.bf16.msra.mxu0 0
  %167 = vmatprep.subr.bf16.mxu0 0
  %168 = vmatpush1.bf16.msra.mxu0 0
  %169 = vmatprep.subr.bf16.mxu0 0
  %170 = vmatpush1.bf16.msra.mxu0 0
  %171 = vmatprep.subr.bf16.mxu0 0
  %172 = vmatpush1.bf16.msra.mxu0 0
  %173 = vmatprep.subr.bf16.mxu0 0
  %174 = vmatpush1.bf16.msra.mxu0 0
  %175 = vmatprep.subr.bf16.mxu0 0
  %176 = vmatpush1.bf16.msra.mxu0 0
  %177 = vmatprep.subr.bf16.mxu0 0
  %178 = vmatpush1.bf16.msra.mxu0 0
  %179 = vmatprep.subr.bf16.mxu0 0
  %180 = vmatpush1.bf16.msra.mxu0 0
  %181 = vmatprep.subr.bf16.mxu0 0
  %182 = vmatpush1.bf16.msra.mxu0 0
  %183 = vmatprep.subr.bf16.mxu0 0
  %184 = vmatpush1.bf16.msra.mxu0 0
  %185 = vmatprep.subr.bf16.mxu0 0
  %186 = vmatpush1.bf16.msra.mxu0 0
  %187 = vmatprep.subr.bf16.mxu0 0
  %188 = vmatpush1.bf16.msra.mxu0 0
  %189 = vmatprep.mubr.bf16.mxu0 0
  %190 = vmatmul.mubr.bf16.gmra.mrb[0].mxu0 %v134
  %v191 = vpop.f32.mrb[0].mxu0
  %v192 = vadd.f32 %v55, %v191
  %v193 = vpop.f32.mrb[0].mxu0
  %v194 = vadd.f32 %v59, %v193
  %v195 = vpop.f32.mrb[0].mxu0
  %v196 = vadd.f32 %v55, %v195
  %v197 = vpop.f32.mrb[0].mxu0
  %v198 = vadd.f32 %v59, %v197
  %199 = vmatprep.mubr.bf16.mxu0 0
  %200 = vmatmul.mubr.bf16.gmra.mrb[0].mxu0 %v137
  %v201 = vpop.f32.mrb[0].mxu0
  %v202 = vadd.f32 %v55, %v201
  %v203 = vpop.f32.mrb[0].mxu0
  %v204 = vadd.f32 %v59, %v203
  %v205 = vpop.f32.mrb[0].mxu0
  %v206 = vadd.f32 %v55, %v205
  %v207 = vpop.f32.mrb[0].mxu0
  %v208 = vadd.f32 %v59, %v207
  %209 = vmatprep.mubr.bf16.mxu0 0
  %210 = vmatmul.mubr.bf16.gmra.mrb[0].mxu0 %v140
  %v211 = vpop.f32.mrb[0].mxu0
  %v212 = vadd.f32 %v55, %v211
  %v213 = vpop.f32.mrb[0].mxu0
  %v214 = vadd.f32 %v59, %v213
  %v215 = vpop.f32.mrb[0].mxu0
  %v216 = vadd.f32 %v55, %v215
  %v217 = vpop.f32.mrb[0].mxu0
  %v218 = vadd.f32 %v59, %v217
  %219 = vmatprep.mubr.bf16.mxu0 0
  %220 = vmatmul.mubr.bf16.gmra.mrb[0].mxu0 %v143
  %v221 = vpop.f32.mrb[0].mxu0
  %v222 = vadd.f32 %v55, %v221
  %v223 = vpop.f32.mrb[0].mxu0
  %v224 = vadd.f32 %v59, %v223
  %v225 = vpop.f32.mrb[0].mxu0
  %v226 = vadd.f32 %v55, %v225
  %v227 = vpop.f32.mrb[0].mxu0
  %v228 = vadd.f32 %v59, %v227
  %229 = vmatprep.mubr.bf16.mxu0 0
  %230 = vmatmul.mubr.bf16.gmra.mrb[0].mxu0 %v146
  %v231 = vpop.f32.mrb[0].mxu0
  %v232 = vadd.f32 %v55, %v231
  %v233 = vpop.f32.mrb[0].mxu0
  %v234 = vadd.f32 %v59, %v233
  %v235 = vpop.f32.mrb[0].mxu0
  %v236 = vadd.f32 %v55, %v235
  %v237 = vpop.f32.mrb[0].mxu0
  %v238 = vadd.f32 %v59, %v237
  %239 = vmatprep.mubr.bf16.mxu0 0
  %240 = vmatmul.mubr.bf16.gmra.mrb[0].mxu0 %v149
  %v241 = vpop.f32.mrb[0].mxu0
  %v242 = vadd.f32 %v55, %v241
  %v243 = vpop.f32.mrb[0].mxu0
  %v244 = vadd.f32 %v59, %v243
  %v245 = vpop.f32.mrb[0].mxu0
  %v246 = vadd.f32 %v55, %v245
  %v247 = vpop.f32.mrb[0].mxu0
  %v248 = vadd.f32 %v59, %v247
  %249 = vmatprep.mubr.bf16.mxu0 0
  %250 = vmatmul.mubr.bf16.gmra.mrb[0].mxu0 %v152
  %v251 = vpop.f32.mrb[0].mxu0
  %v252 = vadd.f32 %v55, %v251
  %v253 = vpop.f32.mrb[0].mxu0
  %v254 = vadd.f32 %v59, %v253
  %v255 = vpop.f32.mrb[0].mxu0
  %v256 = vadd.f32 %v55, %v255
  %v257 = vpop.f32.mrb[0].mxu0
  %v258 = vadd.f32 %v59, %v257
  %259 = vmatprep.mubr.bf16.mxu0 0
  %260 = vmatmul.mubr.bf16.gmra.mrb[0].mxu0 %v155
  %v261 = vpop.f32.mrb[0].mxu0
  %v262 = vadd.f32 %v55, %v261
  %v263 = vpop.f32.mrb[0].mxu0
  %v264 = vadd.f32 %v59, %v263
  %v265 = vpop.f32.mrb[0].mxu0
  %v266 = vadd.f32 %v55, %v265
  %v267 = vpop.f32.mrb[0].mxu0
  %v268 = vadd.f32 %v59, %v267
  %269 = vdwg.mxu0
  %270 = vmatprep.subr.bf16.mxu0 %v127
  %271 = vmatpush1.bf16.msra.mxu0 %v126
  %272 = vmatprep.subr.bf16.mxu0 0
  %273 = vmatpush1.bf16.msra.mxu0 0
  %274 = vmatprep.subr.bf16.mxu0 0
  %275 = vmatpush1.bf16.msra.mxu0 0
  %276 = vmatprep.subr.bf16.mxu0 0
  %277 = vmatpush1.bf16.msra.mxu0 0
  %278 = vmatprep.subr.bf16.mxu0 0
  %279 = vmatpush1.bf16.msra.mxu0 0
  %280 = vmatprep.subr.bf16.mxu0 0
  %281 = vmatpush1.bf16.msra.mxu0 0
  %282 = vmatprep.subr.bf16.mxu0 0
  %283 = vmatpush1.bf16.msra.mxu0 0
  %284 = vmatprep.subr.bf16.mxu0 0
  %285 = vmatpush1.bf16.msra.mxu0 0
  %286 = vmatprep.subr.bf16.mxu0 0
  %287 = vmatpush1.bf16.msra.mxu0 0
  %288 = vmatprep.subr.bf16.mxu0 0
  %289 = vmatpush1.bf16.msra.mxu0 0
  %290 = vmatprep.subr.bf16.mxu0 0
  %291 = vmatpush1.bf16.msra.mxu0 0
  %292 = vmatprep.subr.bf16.mxu0 0
  %293 = vmatpush1.bf16.msra.mxu0 0
  %294 = vmatprep.subr.bf16.mxu0 0
  %295 = vmatpush1.bf16.msra.mxu0 0
  %296 = vmatprep.subr.bf16.mxu0 0
  %297 = vmatpush1.bf16.msra.mxu0 0
  %298 = vmatprep.subr.bf16.mxu0 0
  %299 = vmatpush1.bf16.msra.mxu0 0
  %300 = vmatprep.subr.bf16.mxu0 0
  %301 = vmatpush1.bf16.msra.mxu0 0
  %302 = vmatprep.mubr.bf16.mxu0 0
  %303 = vmatmul.mubr.bf16.gmra.mrb[0].mxu0 %v134
  %v304 = vpop.f32.mrb[0].mxu0
  %v305 = vadd.f32 %v63, %v304
  %v306 = vpop.f32.mrb[0].mxu0
  %v307 = vadd.f32 %v67, %v306
  %v308 = vpop.f32.mrb[0].mxu0
  %v309 = vadd.f32 %v63, %v308
  %v310 = vpop.f32.mrb[0].mxu0
  %v311 = vadd.f32 %v67, %v310
  %312 = vmatprep.mubr.bf16.mxu0 0
  %313 = vmatmul.mubr.bf16.gmra.mrb[0].mxu0 %v137
  %v314 = vpop.f32.mrb[0].mxu0
  %v315 = vadd.f32 %v63, %v314
  %v316 = vpop.f32.mrb[0].mxu0
  %v317 = vadd.f32 %v67, %v316
  %v318 = vpop.f32.mrb[0].mxu0
  %v319 = vadd.f32 %v63, %v318
  %v320 = vpop.f32.mrb[0].mxu0
  %v321 = vadd.f32 %v67, %v320
  %322 = vmatprep.mubr.bf16.mxu0 0
  %323 = vmatmul.mubr.bf16.gmra.mrb[0].mxu0 %v140
  %v324 = vpop.f32.mrb[0].mxu0
  %v325 = vadd.f32 %v63, %v324
  %v326 = vpop.f32.mrb[0].mxu0
  %v327 = vadd.f32 %v67, %v326
  %v328 = vpop.f32.mrb[0].mxu0
  %v329 = vadd.f32 %v63, %v328
  %v330 = vpop.f32.mrb[0].mxu0
  %v331 = vadd.f32 %v67, %v330
  %332 = vmatprep.mubr.bf16.mxu0 0
  %333 = vmatmul.mubr.bf16.gmra.mrb[0].mxu0 %v143
  %v334 = vpop.f32.mrb[0].mxu0
  %v335 = vadd.f32 %v63, %v334
  %v336 = vpop.f32.mrb[0].mxu0
  %v337 = vadd.f32 %v67, %v336
  %v338 = vpop.f32.mrb[0].mxu0
  %v339 = vadd.f32 %v63, %v338
  %v340 = vpop.f32.mrb[0].mxu0
  %v341 = vadd.f32 %v67, %v340
  %342 = vmatprep.mubr.bf16.mxu0 0
  %343 = vmatmul.mubr.bf16.gmra.mrb[0].mxu0 %v146
  %v344 = vpop.f32.mrb[0].mxu0
  %v345 = vadd.f32 %v63, %v344
  %v346 = vpop.f32.mrb[0].mxu0
  %v347 = vadd.f32 %v67, %v346
  %v348 = vpop.f32.mrb[0].mxu0
  %v349 = vadd.f32 %v63, %v348
  %v350 = vpop.f32.mrb[0].mxu0
  %v351 = vadd.f32 %v67, %v350
  %352 = vmatprep.mubr.bf16.mxu0 0
  %353 = vmatmul.mubr.bf16.gmra.mrb[0].mxu0 %v149
  %v354 = vpop.f32.mrb[0].mxu0
  %v355 = vadd.f32 %v63, %v354
  %v356 = vpop.f32.mrb[0].mxu0
  %v357 = vadd.f32 %v67, %v356
  %v358 = vpop.f32.mrb[0].mxu0
  %v359 = vadd.f32 %v63, %v358
  %v360 = vpop.f32.mrb[0].mxu0
  %v361 = vadd.f32 %v67, %v360
  %362 = vmatprep.mubr.bf16.mxu0 0
  %363 = vmatmul.mubr.bf16.gmra.mrb[0].mxu0 %v152
  %v364 = vpop.f32.mrb[0].mxu0
  %v365 = vadd.f32 %v63, %v364
  %v366 = vpop.f32.mrb[0].mxu0
  %v367 = vadd.f32 %v67, %v366
  %v368 = vpop.f32.mrb[0].mxu0
  %v369 = vadd.f32 %v63, %v368
  %v370 = vpop.f32.mrb[0].mxu0
  %v371 = vadd.f32 %v67, %v370
  %372 = vmatprep.mubr.bf16.mxu0 0
  %373 = vmatmul.mubr.bf16.gmra.mrb[0].mxu0 %v155
  %v374 = vpop.f32.mrb[0].mxu0
  %v375 = vadd.f32 %v63, %v374
  %v376 = vpop.f32.mrb[0].mxu0
  %v377 = vadd.f32 %v67, %v376
  %v378 = vpop.f32.mrb[0].mxu0
  %v379 = vadd.f32 %v63, %v378
  %v380 = vpop.f32.mrb[0].mxu0
  %v381 = vadd.f32 %v67, %v380
  %382 = vdwg.mxu0
  %383 = vst [vmem:[#allocation2] sm:$0xff] %v192
  %384 = vst [vmem:[#allocation2 + $0x8] sm:$0xff] %v194
  %385 = vst [vmem:[#allocation2 + $0x10] sm:$0xff] %v305
  %386 = vst [vmem:[#allocation2 + $0x18] sm:$0xff] %v307
  %387 = vst [vmem:[#allocation2 + $0x20] sm:$0xff] %v196
  %388 = vst [vmem:[#allocation2 + $0x28] sm:$0xff] %v198
  %389 = vst [vmem:[#allocation2 + $0x30] sm:$0xff] %v309
  %390 = vst [vmem:[#allocation2 + $0x38] sm:$0xff] %v311
  %391 = vst [vmem:[#allocation2 + $0x40] sm:$0xff] %v202
  %392 = vst [vmem:[#allocation2 + $0x48] sm:$0xff] %v204
  %393 = vst [vmem:[#allocation2 + $0x50] sm:$0xff] %v315
  %394 = vst [vmem:[#allocation2 + $0x58] sm:$0xff] %v317
  %395 = vst [vmem:[#allocation2 + $0x60] sm:$0xff] %v206
  %396 = vst [vmem:[#allocation2 + $0x68] sm:$0xff] %v208
  %397 = vst [vmem:[#allocation2 + $0x70] sm:$0xff] %v319
  %398 = vst [vmem:[#allocation2 + $0x78] sm:$0xff] %v321
  %399 = vst [vmem:[#allocation2 + $0x80] sm:$0xff] %v212
  %400 = vst [vmem:[#allocation2 + $0x88] sm:$0xff] %v214
  %401 = vst [vmem:[#allocation2 + $0x90] sm:$0xff] %v325
  %402 = vst [vmem:[#allocation2 + $0x98] sm:$0xff] %v327
  %403 = vst [vmem:[#allocation2 + $0xa0] sm:$0xff] %v216
  %404 = vst [vmem:[#allocation2 + $0xa8] sm:$0xff] %v218
  %405 = vst [vmem:[#allocation2 + $0xb0] sm:$0xff] %v329
  %406 = vst [vmem:[#allocation2 + $0xb8] sm:$0xff] %v331
  %407 = vst [vmem:[#allocation2 + $0xc0] sm:$0xff] %v222
  %408 = vst [vmem:[#allocation2 + $0xc8] sm:$0xff] %v224
  %409 = vst [vmem:[#allocation2 + $0xd0] sm:$0xff] %v335
  %410 = vst [vmem:[#allocation2 + $0xd8] sm:$0xff] %v337
  %411 = vst [vmem:[#allocation2 + $0xe0] sm:$0xff] %v226
  %412 = vst [vmem:[#allocation2 + $0xe8] sm:$0xff] %v228
  %413 = vst [vmem:[#allocation2 + $0xf0] sm:$0xff] %v339
  %414 = vst [vmem:[#allocation2 + $0xf8] sm:$0xff] %v341
  %415 = vst [vmem:[#allocation2 + $0x100] sm:$0xff] %v232
  %416 = vst [vmem:[#allocation2 + $0x108] sm:$0xff] %v234
  %417 = vst [vmem:[#allocation2 + $0x110] sm:$0xff] %v345
  %418 = vst [vmem:[#allocation2 + $0x118] sm:$0xff] %v347
  %419 = vst [vmem:[#allocation2 + $0x120] sm:$0xff] %v236
  %420 = vst [vmem:[#allocation2 + $0x128] sm:$0xff] %v238
  %421 = vst [vmem:[#allocation2 + $0x130] sm:$0xff] %v349
  %422 = vst [vmem:[#allocation2 + $0x138] sm:$0xff] %v351
  %423 = vst [vmem:[#allocation2 + $0x140] sm:$0xff] %v242
  %424 = vst [vmem:[#allocation2 + $0x148] sm:$0xff] %v244
  %425 = vst [vmem:[#allocation2 + $0x150] sm:$0xff] %v355
  %426 = vst [vmem:[#allocation2 + $0x158] sm:$0xff] %v357
  %427 = vst [vmem:[#allocation2 + $0x160] sm:$0xff] %v246
  %428 = vst [vmem:[#allocation2 + $0x168] sm:$0xff] %v248
  %429 = vst [vmem:[#allocation2 + $0x170] sm:$0xff] %v359
  %430 = vst [vmem:[#allocation2 + $0x178] sm:$0xff] %v361
  %431 = vst [vmem:[#allocation2 + $0x180] sm:$0xff] %v252
  %432 = vst [vmem:[#allocation2 + $0x188] sm:$0xff] %v254
  %433 = vst [vmem:[#allocation2 + $0x190] sm:$0xff] %v365
  %434 = vst [vmem:[#allocation2 + $0x198] sm:$0xff] %v367
  %435 = vst [vmem:[#allocation2 + $0x1a0] sm:$0xff] %v256
  %436 = vst [vmem:[#allocation2 + $0x1a8] sm:$0xff] %v258
  %437 = vst [vmem:[#allocation2 + $0x1b0] sm:$0xff] %v369
  %438 = vst [vmem:[#allocation2 + $0x1b8] sm:$0xff] %v371
  %439 = vst [vmem:[#allocation2 + $0x1c0] sm:$0xff] %v262
  %440 = vst [vmem:[#allocation2 + $0x1c8] sm:$0xff] %v264
  %441 = vst [vmem:[#allocation2 + $0x1d0] sm:$0xff] %v375
  %442 = vst [vmem:[#allocation2 + $0x1d8] sm:$0xff] %v377
  %443 = vst [vmem:[#allocation2 + $0x1e0] sm:$0xff] %v266
  %444 = vst [vmem:[#allocation2 + $0x1e8] sm:$0xff] %v268
  %445 = vst [vmem:[#allocation2 + $0x1f0] sm:$0xff] %v379
  %446 = vst [vmem:[#allocation2 + $0x1f8] sm:$0xff] %v381
  %v447 = vld [vmem:[#allocation2] sm:$0xff]
  %v448 = vld [vmem:[#allocation2 + $0x8] sm:$0xff]
  %v449 = vld [vmem:[#allocation2 + $0x10] sm:$0xff]
  %v450 = vld [vmem:[#allocation2 + $0x18] sm:$0xff]
  %v451 = vld [vmem:[#allocation2 + $0x20] sm:$0xff]
  %v452 = vld [vmem:[#allocation2 + $0x28] sm:$0xff]
  %v453 = vld [vmem:[#allocation2 + $0x30] sm:$0xff]
  %v454 = vld [vmem:[#allocation2 + $0x38] sm:$0xff]
  %v455 = vld [vmem:[%s2] sm:$0xff]
  %v456 = vld [vmem:[%s2 + $0x8] sm:$0xff]
  %v457 = vld [vmem:[%s2 + $0x10] sm:$0xff]
  %v458 = vld [vmem:[%s2 + $0x18] sm:$0xff]
  %v459 = vld [vmem:[%s2 + $0x20] sm:$0xff]
  %v460 = vld [vmem:[%s2 + $0x28] sm:$0xff]
  %v461 = vld [vmem:[%s2 + $0x30] sm:$0xff]
  %v462 = vld [vmem:[%s2 + $0x38] sm:$0xff]
  %v463 = vld [vmem:[%s2 + $0x40] sm:$0xff]
  %v464 = vld [vmem:[%s2 + $0x48] sm:$0xff]
  %v465 = vld [vmem:[%s2 + $0x50] sm:$0xff]
  %v466 = vld [vmem:[%s2 + $0x58] sm:$0xff]
  %v467 = vld [vmem:[%s2 + $0x60] sm:$0xff]
  %v468 = vld [vmem:[%s2 + $0x68] sm:$0xff]
  %v469 = vld [vmem:[%s2 + $0x70] sm:$0xff]
  %v470 = vld [vmem:[%s2 + $0x78] sm:$0xff]
  %v471 = vld [vmem:[%s2 + $0x80] sm:$0xff]
  %v472 = vld [vmem:[%s2 + $0x88] sm:$0xff]
  %v473 = vld [vmem:[%s2 + $0x90] sm:$0xff]
  %v474 = vld [vmem:[%s2 + $0x98] sm:$0xff]
  %v475 = vld [vmem:[%s2 + $0xa0] sm:$0xff]
  %v476 = vld [vmem:[%s2 + $0xa8] sm:$0xff]
  %v477 = vld [vmem:[%s2 + $0xb0] sm:$0xff]
  %v478 = vld [vmem:[%s2 + $0xb8] sm:$0xff]
  %v479 = vld [vmem:[%s2 + $0xc0] sm:$0xff]
  %v480 = vld [vmem:[%s2 + $0xc8] sm:$0xff]
  %v481 = vld [vmem:[%s2 + $0xd0] sm:$0xff]
  %v482 = vld [vmem:[%s2 + $0xd8] sm:$0xff]
  %v483 = vld [vmem:[%s2 + $0xe0] sm:$0xff]
  %v484 = vld [vmem:[%s2 + $0xe8] sm:$0xff]
  %v485 = vld [vmem:[%s2 + $0xf0] sm:$0xff]
  %v486 = vld [vmem:[%s2 + $0xf8] sm:$0xff]
  %v519 = vunpack.c.l.b16 %v455
  %v520 = vunpack.c.h.b16 %v455
  %v521 = vunpack.c.l.b16 %v456
  %v522 = vunpack.c.h.b16 %v456
  %v523 = vunpack.c.l.b16 %v457
  %v524 = vunpack.c.h.b16 %v457
  %v525 = vunpack.c.l.b16 %v458
  %v526 = vunpack.c.h.b16 %v458
  %v527 = vunpack.c.l.b16 %v459
  %v528 = vunpack.c.h.b16 %v459
  %v529 = vunpack.c.l.b16 %v460
  %v530 = vunpack.c.h.b16 %v460
  %v531 = vunpack.c.l.b16 %v461
  %v532 = vunpack.c.h.b16 %v461
  %v533 = vunpack.c.l.b16 %v462
  %v534 = vunpack.c.h.b16 %v462
  %v535 = vunpack.c.l.b16 %v463
  %v536 = vunpack.c.h.b16 %v463
  %v537 = vunpack.c.l.b16 %v464
  %v538 = vunpack.c.h.b16 %v464
  %v539 = vunpack.c.l.b16 %v465
  %v540 = vunpack.c.h.b16 %v465
  %v541 = vunpack.c.l.b16 %v466
  %v542 = vunpack.c.h.b16 %v466
  %v543 = vunpack.c.l.b16 %v467
  %v544 = vunpack.c.h.b16 %v467
  %v545 = vunpack.c.l.b16 %v468
  %v546 = vunpack.c.h.b16 %v468
  %v547 = vunpack.c.l.b16 %v469
  %v548 = vunpack.c.h.b16 %v469
  %v549 = vunpack.c.l.b16 %v470
  %v550 = vunpack.c.h.b16 %v470
  %v551 = vunpack.c.l.b16 %v471
  %v552 = vunpack.c.h.b16 %v471
  %v553 = vunpack.c.l.b16 %v472
  %v554 = vunpack.c.h.b16 %v472
  %v555 = vunpack.c.l.b16 %v473
  %v556 = vunpack.c.h.b16 %v473
  %v557 = vunpack.c.l.b16 %v474
  %v558 = vunpack.c.h.b16 %v474
  %v559 = vunpack.c.l.b16 %v475
  %v560 = vunpack.c.h.b16 %v475
  %v561 = vunpack.c.l.b16 %v476
  %v562 = vunpack.c.h.b16 %v476
  %v563 = vunpack.c.l.b16 %v477
  %v564 = vunpack.c.h.b16 %v477
  %v565 = vunpack.c.l.b16 %v478
  %v566 = vunpack.c.h.b16 %v478
  %v567 = vunpack.c.l.b16 %v479
  %v568 = vunpack.c.h.b16 %v479
  %v569 = vunpack.c.l.b16 %v480
  %v570 = vunpack.c.h.b16 %v480
  %v571 = vunpack.c.l.b16 %v481
  %v572 = vunpack.c.h.b16 %v481
  %v573 = vunpack.c.l.b16 %v482
  %v574 = vunpack.c.h.b16 %v482
  %v575 = vunpack.c.l.b16 %v483
  %v576 = vunpack.c.h.b16 %v483
  %v577 = vunpack.c.l.b16 %v484
  %v578 = vunpack.c.h.b16 %v484
  %v579 = vunpack.c.l.b16 %v485
  %v580 = vunpack.c.h.b16 %v485
  %v581 = vunpack.c.l.b16 %v486
  %v582 = vunpack.c.h.b16 %v486
  %v583 = vpack.c.b16 %v523, %v519
  %v584 = vpack.c.b16 %v524, %v520
  %v585 = vpack.c.b16 %v525, %v521
  %v586 = vpack.c.b16 %v526, %v522
  %v587 = vpack.c.b16 %v531, %v527
  %v588 = vpack.c.b16 %v532, %v528
  %v589 = vpack.c.b16 %v533, %v529
  %v590 = vpack.c.b16 %v534, %v530
  %v591 = vpack.c.b16 %v539, %v535
  %v592 = vpack.c.b16 %v540, %v536
  %v593 = vpack.c.b16 %v541, %v537
  %v594 = vpack.c.b16 %v542, %v538
  %v595 = vpack.c.b16 %v547, %v543
  %v596 = vpack.c.b16 %v548, %v544
  %v597 = vpack.c.b16 %v549, %v545
  %v598 = vpack.c.b16 %v550, %v546
  %v599 = vpack.c.b16 %v555, %v551
  %v600 = vpack.c.b16 %v556, %v552
  %v601 = vpack.c.b16 %v557, %v553
  %v602 = vpack.c.b16 %v558, %v554
  %v603 = vpack.c.b16 %v563, %v559
  %v604 = vpack.c.b16 %v564, %v560
  %v605 = vpack.c.b16 %v565, %v561
  %v606 = vpack.c.b16 %v566, %v562
  %v607 = vpack.c.b16 %v571, %v567
  %v608 = vpack.c.b16 %v572, %v568
  %v609 = vpack.c.b16 %v573, %v569
  %v610 = vpack.c.b16 %v574, %v570
  %v611 = vpack.c.b16 %v579, %v575
  %v612 = vpack.c.b16 %v580, %v576
  %v613 = vpack.c.b16 %v581, %v577
  %v614 = vpack.c.b16 %v582, %v578
  %647 = vmatprep.subr.bf16.mxu0 %v584
  %648 = vmatpush1.bf16.msra.mxu0 %v583
  %649 = vmatprep.subr.bf16.mxu0 %v588
  %650 = vmatpush1.bf16.msra.mxu0 %v587
  %651 = vmatprep.subr.bf16.mxu0 %v592
  %652 = vmatpush1.bf16.msra.mxu0 %v591
  %653 = vmatprep.subr.bf16.mxu0 %v596
  %654 = vmatpush1.bf16.msra.mxu0 %v595
  %655 = vmatprep.subr.bf16.mxu0 %v600
  %656 = vmatpush1.bf16.msra.mxu0 %v599
  %657 = vmatprep.subr.bf16.mxu0 %v604
  %658 = vmatpush1.bf16.msra.mxu0 %v603
  %659 = vmatprep.subr.bf16.mxu0 %v608
  %660 = vmatpush1.bf16.msra.mxu0 %v607
  %661 = vmatprep.subr.bf16.mxu0 %v612
  %662 = vmatpush1.bf16.msra.mxu0 %v611
  %663 = vmatprep.subr.bf16.mxu0 0
  %664 = vmatpush1.bf16.msra.mxu0 0
  %665 = vmatprep.subr.bf16.mxu0 0
  %666 = vmatpush1.bf16.msra.mxu0 0
  %667 = vmatprep.subr.bf16.mxu0 0
  %668 = vmatpush1.bf16.msra.mxu0 0
  %669 = vmatprep.subr.bf16.mxu0 0
  %670 = vmatpush1.bf16.msra.mxu0 0
  %671 = vmatprep.subr.bf16.mxu0 0
  %672 = vmatpush1.bf16.msra.mxu0 0
  %673 = vmatprep.subr.bf16.mxu0 0
  %674 = vmatpush1.bf16.msra.mxu0 0
  %675 = vmatprep.subr.bf16.mxu0 0
  %676 = vmatpush1.bf16.msra.mxu0 0
  %677 = vmatprep.subr.bf16.mxu0 0
  %678 = vmatpush1.bf16.msra.mxu0 0
  %679 = vmatprep.mubr.bf16.mxu0 0
  %680 = vmatmul.mubr.bf16.gmra.mrb[0].mxu0 0
  %v681 = vpop.f32.mrb[0].mxu0
  %v682 = vadd.f32 0.0, %v681
  %v683 = vpop.f32.mrb[0].mxu0
  %v684 = vadd.f32 0.0, %v683
  %v685 = vpop.f32.mrb[0].mxu0
  %v686 = vadd.f32 0.0, %v685
  %v687 = vpop.f32.mrb[0].mxu0
  %v688 = vadd.f32 0.0, %v687
  %689 = vdwg.mxu0
  %690 = vmatprep.subr.bf16.mxu0 %v586
  %691 = vmatpush1.bf16.msra.mxu0 %v585
  %692 = vmatprep.subr.bf16.mxu0 %v590
  %693 = vmatpush1.bf16.msra.mxu0 %v589
  %694 = vmatprep.subr.bf16.mxu0 %v594
  %695 = vmatpush1.bf16.msra.mxu0 %v593
  %696 = vmatprep.subr.bf16.mxu0 %v598
  %697 = vmatpush1.bf16.msra.mxu0 %v597
  %698 = vmatprep.subr.bf16.mxu0 %v602
  %699 = vmatpush1.bf16.msra.mxu0 %v601
  %700 = vmatprep.subr.bf16.mxu0 %v606
  %701 = vmatpush1.bf16.msra.mxu0 %v605
  %702 = vmatprep.subr.bf16.mxu0 %v610
  %703 = vmatpush1.bf16.msra.mxu0 %v609
  %704 = vmatprep.subr.bf16.mxu0 %v614
  %705 = vmatpush1.bf16.msra.mxu0 %v613
  %706 = vmatprep.subr.bf16.mxu0 0
  %707 = vmatpush1.bf16.msra.mxu0 0
  %708 = vmatprep.subr.bf16.mxu0 0
  %709 = vmatpush1.bf16.msra.mxu0 0
  %710 = vmatprep.subr.bf16.mxu0 0
  %711 = vmatpush1.bf16.msra.mxu0 0
  %712 = vmatprep.subr.bf16.mxu0 0
  %713 = vmatpush1.bf16.msra.mxu0 0
  %714 = vmatprep.subr.bf16.mxu0 0
  %715 = vmatpush1.bf16.msra.mxu0 0
  %716 = vmatprep.subr.bf16.mxu0 0
  %717 = vmatpush1.bf16.msra.mxu0 0
  %718 = vmatprep.subr.bf16.mxu0 0
  %719 = vmatpush1.bf16.msra.mxu0 0
  %720 = vmatprep.subr.bf16.mxu0 0
  %721 = vmatpush1.bf16.msra.mxu0 0
  %722 = vmatprep.mubr.bf16.mxu0 0
  %723 = vmatmul.mubr.bf16.gmra.mrb[0].mxu0 0
  %v724 = vpop.f32.mrb[0].mxu0
  %v725 = vadd.f32 0.0, %v724
  %v726 = vpop.f32.mrb[0].mxu0
  %v727 = vadd.f32 0.0, %v726
  %v728 = vpop.f32.mrb[0].mxu0
  %v729 = vadd.f32 0.0, %v728
  %v730 = vpop.f32.mrb[0].mxu0
  %v731 = vadd.f32 0.0, %v730
  %732 = vdwg.mxu0
  %v733 = vadd.f32 %v447, %v682
  %v734 = vadd.f32 %v448, %v684
  %v735 = vadd.f32 %v449, %v725
  %v736 = vadd.f32 %v450, %v727
  %v737 = vadd.f32 %v451, %v686
  %v738 = vadd.f32 %v452, %v688
  %v739 = vadd.f32 %v453, %v729
  %v740 = vadd.f32 %v454, %v731
  %v741 = vxor.u32 %v733, 2147483648
  %v742 = vxor.u32 %v737, 2147483648
  %v743 = vmul.f32 %v741, 1.442695
  %v744 = vpow.pop %v743
  %v745 = vmul.f32 %v742, 1.442695
  %v746 = vpow.pop %v745
  %v747 = vadd.f32 %v744, 1.0
  %v748 = vadd.f32 %v746, 1.0
  %v749 = vrcp.pop %v747
  %v750 = vmul.f32 1.0, %v749
  %v751 = vrcp.pop %v748
  %v752 = vmul.f32 1.0, %v751
  %v753 = vxor.u32 %v734, 2147483648
  %v754 = vxor.u32 %v738, 2147483648
  %v755 = vmul.f32 %v753, 1.442695
  %v756 = vpow.pop %v755
  %v757 = vmul.f32 %v754, 1.442695
  %v758 = vpow.pop %v757
  %v759 = vadd.f32 %v756, 1.0
  %v760 = vadd.f32 %v758, 1.0
  %v761 = vrcp.pop %v759
  %v762 = vmul.f32 1.0, %v761
  %v763 = vrcp.pop %v760
  %v764 = vmul.f32 1.0, %v763
  %v765 = vtanh.pop %v735
  %v766 = vtanh.pop %v739
  %v767 = vxor.u32 %v736, 2147483648
  %v768 = vxor.u32 %v740, 2147483648
  %v769 = vmul.f32 %v767, 1.442695
  %v770 = vpow.pop %v769
  %v771 = vmul.f32 %v768, 1.442695
  %v772 = vpow.pop %v771
  %v773 = vadd.f32 %v770, 1.0
  %v774 = vadd.f32 %v772, 1.0
  %v775 = vrcp.pop %v773
  %v776 = vmul.f32 1.0, %v775
  %v777 = vrcp.pop %v774
  %v778 = vmul.f32 1.0, %v777
  %v779 = vmul.f32 %v762, 0.0
  %v780 = vmul.f32 %v764, 0.0
  %v781 = vmul.f32 %v750, %v765
  %v782 = vmul.f32 %v752, %v766
  %v783 = vadd.f32 %v779, %v781
  %v784 = vadd.f32 %v780, %v782
  %v785 = vtanh.pop %v783
  %v786 = vtanh.pop %v784
  %v787 = vmul.f32 %v776, %v785
  %v788 = vmul.f32 %v778, %v786
  %v789 = vld [vmem:[#allocation2 + $0x40] sm:$0xff]
  %v790 = vld [vmem:[#allocation2 + $0x48] sm:$0xff]
  %v791 = vld [vmem:[#allocation2 + $0x50] sm:$0xff]
  %v792 = vld [vmem:[#allocation2 + $0x58] sm:$0xff]
  %v793 = vld [vmem:[#allocation2 + $0x60] sm:$0xff]
  %v794 = vld [vmem:[#allocation2 + $0x68] sm:$0xff]
  %v795 = vld [vmem:[#allocation2 + $0x70] sm:$0xff]
  %v796 = vld [vmem:[#allocation2 + $0x78] sm:$0xff]
  %v797 = vpack.c.bf16 %v788, %v787
  %798 = vmatprep.subr.bf16.mxu0 %v584
  %799 = vmatpush1.bf16.msra.mxu0 %v583
  %800 = vmatprep.subr.bf16.mxu0 %v588
  %801 = vmatpush1.bf16.msra.mxu0 %v587
  %802 = vmatprep.subr.bf16.mxu0 %v592
  %803 = vmatpush1.bf16.msra.mxu0 %v591
  %804 = vmatprep.subr.bf16.mxu0 %v596
  %805 = vmatpush1.bf16.msra.mxu0 %v595
  %806 = vmatprep.subr.bf16.mxu0 %v600
  %807 = vmatpush1.bf16.msra.mxu0 %v599
  %808 = vmatprep.subr.bf16.mxu0 %v604
  %809 = vmatpush1.bf16.msra.mxu0 %v603
  %810 = vmatprep.subr.bf16.mxu0 %v608
  %811 = vmatpush1.bf16.msra.mxu0 %v607
  %812 = vmatprep.subr.bf16.mxu0 %v612
  %813 = vmatpush1.bf16.msra.mxu0 %v611
  %814 = vmatprep.subr.bf16.mxu0 0
  %815 = vmatpush1.bf16.msra.mxu0 0
  %816 = vmatprep.subr.bf16.mxu0 0
  %817 = vmatpush1.bf16.msra.mxu0 0
  %818 = vmatprep.subr.bf16.mxu0 0
  %819 = vmatpush1.bf16.msra.mxu0 0
  %820 = vmatprep.subr.bf16.mxu0 0
  %821 = vmatpush1.bf16.msra.mxu0 0
  %822 = vmatprep.subr.bf16.mxu0 0
  %823 = vmatpush1.bf16.msra.mxu0 0
  %824 = vmatprep.subr.bf16.mxu0 0
  %825 = vmatpush1.bf16.msra.mxu0 0
  %826 = vmatprep.subr.bf16.mxu0 0
  %827 = vmatpush1.bf16.msra.mxu0 0
  %828 = vmatprep.subr.bf16.mxu0 0
  %829 = vmatpush1.bf16.msra.mxu0 0
  %830 = vmatprep.mubr.bf16.mxu0 0
  %831 = vmatmul.mubr.bf16.gmra.mrb[0].mxu0 %v797
  %v832 = vpop.f32.mrb[0].mxu0
  %v833 = vadd.f32 0.0, %v832
  %v834 = vpop.f32.mrb[0].mxu0
  %v835 = vadd.f32 0.0, %v834
  %v836 = vpop.f32.mrb[0].mxu0
  %v837 = vadd.f32 0.0, %v836
  %v838 = vpop.f32.mrb[0].mxu0
  %v839 = vadd.f32 0.0, %v838
  %840 = vdwg.mxu0
  %841 = vmatprep.subr.bf16.mxu0 %v586
  %842 = vmatpush1.bf16.msra.mxu0 %v585
  %843 = vmatprep.subr.bf16.mxu0 %v590
  %844 = vmatpush1.bf16.msra.mxu0 %v589
  %845 = vmatprep.subr.bf16.mxu0 %v594
  %846 = vmatpush1.bf16.msra.mxu0 %v593
  %847 = vmatprep.subr.bf16.mxu0 %v598
  %848 = vmatpush1.bf16.msra.mxu0 %v597
  %849 = vmatprep.subr.bf16.mxu0 %v602
  %850 = vmatpush1.bf16.msra.mxu0 %v601
  %851 = vmatprep.subr.bf16.mxu0 %v606
  %852 = vmatpush1.bf16.msra.mxu0 %v605
  %853 = vmatprep.subr.bf16.mxu0 %v610
  %854 = vmatpush1.bf16.msra.mxu0 %v609
  %855 = vmatprep.subr.bf16.mxu0 %v614
  %856 = vmatpush1.bf16.msra.mxu0 %v613
  %857 = vmatprep.subr.bf16.mxu0 0
  %858 = vmatpush1.bf16.msra.mxu0 0
  %859 = vmatprep.subr.bf16.mxu0 0
  %860 = vmatpush1.bf16.msra.mxu0 0
  %861 = vmatprep.subr.bf16.mxu0 0
  %862 = vmatpush1.bf16.msra.mxu0 0
  %863 = vmatprep.subr.bf16.mxu0 0
  %864 = vmatpush1.bf16.msra.mxu0 0
  %865 = vmatprep.subr.bf16.mxu0 0
  %866 = vmatpush1.bf16.msra.mxu0 0
  %867 = vmatprep.subr.bf16.mxu0 0
  %868 = vmatpush1.bf16.msra.mxu0 0
  %869 = vmatprep.subr.bf16.mxu0 0
  %870 = vmatpush1.bf16.msra.mxu0 0
  %871 = vmatprep.subr.bf16.mxu0 0
  %872 = vmatpush1.bf16.msra.mxu0 0
  %873 = vmatprep.mubr.bf16.mxu0 0
  %874 = vmatmul.mubr.bf16.gmra.mrb[0].mxu0 %v797
  %v875 = vpop.f32.mrb[0].mxu0
  %v876 = vadd.f32 0.0, %v875
  %v877 = vpop.f32.mrb[0].mxu0
  %v878 = vadd.f32 0.0, %v877
  %v879 = vpop.f32.mrb[0].mxu0
  %v880 = vadd.f32 0.0, %v879
  %v881 = vpop.f32.mrb[0].mxu0
  %v882 = vadd.f32 0.0, %v881
  %883 = vdwg.mxu0
  %v884 = vadd.f32 %v789, %v833
  %v885 = vadd.f32 %v790, %v835
  %v886 = vadd.f32 %v791, %v876
  %v887 = vadd.f32 %v792, %v878
  %v888 = vadd.f32 %v793, %v837
  %v889 = vadd.f32 %v794, %v839
  %v890 = vadd.f32 %v795, %v880
  %v891 = vadd.f32 %v796, %v882
  %v892 = vxor.u32 %v884, 2147483648
  %v893 = vxor.u32 %v888, 2147483648
  %v894 = vmul.f32 %v892, 1.442695
  %v895 = vpow.pop %v894
  %v896 = vmul.f32 %v893, 1.442695
  %v897 = vpow.pop %v896
  %v898 = vadd.f32 %v895, 1.0
  %v899 = vadd.f32 %v897, 1.0
  %v900 = vrcp.pop %v898
  %v901 = vmul.f32 1.0, %v900
  %v902 = vrcp.pop %v899
  %v903 = vmul.f32 1.0, %v902
  %v904 = vxor.u32 %v885, 2147483648
  %v905 = vxor.u32 %v889, 2147483648
  %v906 = vmul.f32 %v904, 1.442695
  %v907 = vpow.pop %v906
  %v908 = vmul.f32 %v905, 1.442695
  %v909 = vpow.pop %v908
  %v910 = vadd.f32 %v907, 1.0
  %v911 = vadd.f32 %v909, 1.0
  %v912 = vrcp.pop %v910
  %v913 = vmul.f32 1.0, %v912
  %v914 = vrcp.pop %v911
  %v915 = vmul.f32 1.0, %v914
  %v916 = vtanh.pop %v886
  %v917 = vtanh.pop %v890
  %v918 = vxor.u32 %v887, 2147483648
  %v919 = vxor.u32 %v891, 2147483648
  %v920 = vmul.f32 %v918, 1.442695
  %v921 = vpow.pop %v920
  %v922 = vmul.f32 %v919, 1.442695
  %v923 = vpow.pop %v922
  %v924 = vadd.f32 %v921, 1.0
  %v925 = vadd.f32 %v923, 1.0
  %v926 = vrcp.pop %v924
  %v927 = vmul.f32 1.0, %v926
  %v928 = vrcp.pop %v925
  %v929 = vmul.f32 1.0, %v928
  %v930 = vmul.f32 %v913, %v783
  %v931 = vmul.f32 %v915, %v784
  %v932 = vmul.f32 %v901, %v916
  %v933 = vmul.f32 %v903, %v917
  %v934 = vadd.f32 %v930, %v932
  %v935 = vadd.f32 %v931, %v933
  %v936 = vtanh.pop %v934
  %v937 = vtanh.pop %v935
  %v938 = vmul.f32 %v927, %v936
  %v939 = vmul.f32 %v929, %v937
  %v940 = vld [vmem:[#allocation2 + $0x80] sm:$0xff]
  %v941 = vld [vmem:[#allocation2 + $0x88] sm:$0xff]
  %v942 = vld [vmem:[#allocation2 + $0x90] sm:$0xff]
  %v943 = vld [vmem:[#allocation2 + $0x98] sm:$0xff]
  %v944 = vld [vmem:[#allocation2 + $0xa0] sm:$0xff]
  %v945 = vld [vmem:[#allocation2 + $0xa8] sm:$0xff]
  %v946 = vld [vmem:[#allocation2 + $0xb0] sm:$0xff]
  %v947 = vld [vmem:[#allocation2 + $0xb8] sm:$0xff]
  %v948 = vpack.c.bf16 %v939, %v938
  %949 = vmatprep.subr.bf16.mxu0 %v584
  %950 = vmatpush1.bf16.msra.mxu0 %v583
  %951 = vmatprep.subr.bf16.mxu0 %v588
  %952 = vmatpush1.bf16.msra.mxu0 %v587
  %953 = vmatprep.subr.bf16.mxu0 %v592
  %954 = vmatpush1.bf16.msra.mxu0 %v591
  %955 = vmatprep.subr.bf16.mxu0 %v596
  %956 = vmatpush1.bf16.msra.mxu0 %v595
  %957 = vmatprep.subr.bf16.mxu0 %v600
  %958 = vmatpush1.bf16.msra.mxu0 %v599
  %959 = vmatprep.subr.bf16.mxu0 %v604
  %960 = vmatpush1.bf16.msra.mxu0 %v603
  %961 = vmatprep.subr.bf16.mxu0 %v608
  %962 = vmatpush1.bf16.msra.mxu0 %v607
  %963 = vmatprep.subr.bf16.mxu0 %v612
  %964 = vmatpush1.bf16.msra.mxu0 %v611
  %965 = vmatprep.subr.bf16.mxu0 0
  %966 = vmatpush1.bf16.msra.mxu0 0
  %967 = vmatprep.subr.bf16.mxu0 0
  %968 = vmatpush1.bf16.msra.mxu0 0
  %969 = vmatprep.subr.bf16.mxu0 0
  %970 = vmatpush1.bf16.msra.mxu0 0
  %971 = vmatprep.subr.bf16.mxu0 0
  %972 = vmatpush1.bf16.msra.mxu0 0
  %973 = vmatprep.subr.bf16.mxu0 0
  %974 = vmatpush1.bf16.msra.mxu0 0
  %975 = vmatprep.subr.bf16.mxu0 0
  %976 = vmatpush1.bf16.msra.mxu0 0
  %977 = vmatprep.subr.bf16.mxu0 0
  %978 = vmatpush1.bf16.msra.mxu0 0
  %979 = vmatprep.subr.bf16.mxu0 0
  %980 = vmatpush1.bf16.msra.mxu0 0
  %981 = vmatprep.mubr.bf16.mxu0 0
  %982 = vmatmul.mubr.bf16.gmra.mrb[0].mxu0 %v948
  %v983 = vpop.f32.mrb[0].mxu0
  %v984 = vadd.f32 0.0, %v983
  %v985 = vpop.f32.mrb[0].mxu0
  %v986 = vadd.f32 0.0, %v985
  %v987 = vpop.f32.mrb[0].mxu0
  %v988 = vadd.f32 0.0, %v987
  %v989 = vpop.f32.mrb[0].mxu0
  %v990 = vadd.f32 0.0, %v989
  %991 = vdwg.mxu0
  %992 = vmatprep.subr.bf16.mxu0 %v586
  %993 = vmatpush1.bf16.msra.mxu0 %v585
  %994 = vmatprep.subr.bf16.mxu0 %v590
  %995 = vmatpush1.bf16.msra.mxu0 %v589
  %996 = vmatprep.subr.bf16.mxu0 %v594
  %997 = vmatpush1.bf16.msra.mxu0 %v593
  %998 = vmatprep.subr.bf16.mxu0 %v598
  %999 = vmatpush1.bf16.msra.mxu0 %v597
  %1000 = vmatprep.subr.bf16.mxu0 %v602
  %1001 = vmatpush1.bf16.msra.mxu0 %v601
  %1002 = vmatprep.subr.bf16.mxu0 %v606
  %1003 = vmatpush1.bf16.msra.mxu0 %v605
  %1004 = vmatprep.subr.bf16.mxu0 %v610
  %1005 = vmatpush1.bf16.msra.mxu0 %v609
  %1006 = vmatprep.subr.bf16.mxu0 %v614
  %1007 = vmatpush1.bf16.msra.mxu0 %v613
  %1008 = vmatprep.subr.bf16.mxu0 0
  %1009 = vmatpush1.bf16.msra.mxu0 0
  %1010 = vmatprep.subr.bf16.mxu0 0
  %1011 = vmatpush1.bf16.msra.mxu0 0
  %1012 = vmatprep.subr.bf16.mxu0 0
  %1013 = vmatpush1.bf16.msra.mxu0 0
  %1014 = vmatprep.subr.bf16.mxu0 0
  %1015 = vmatpush1.bf16.msra.mxu0 0
  %1016 = vmatprep.subr.bf16.mxu0 0
  %1017 = vmatpush1.bf16.msra.mxu0 0
  %1018 = vmatprep.subr.bf16.mxu0 0
  %1019 = vmatpush1.bf16.msra.mxu0 0
  %1020 = vmatprep.subr.bf16.mxu0 0
  %1021 = vmatpush1.bf16.msra.mxu0 0
  %1022 = vmatprep.subr.bf16.mxu0 0
  %1023 = vmatpush1.bf16.msra.mxu0 0
  %1024 = vmatprep.mubr.bf16.mxu0 0
  %1025 = vmatmul.mubr.bf16.gmra.mrb[0].mxu0 %v948
  %v1026 = vpop.f32.mrb[0].mxu0
  %v1027 = vadd.f32 0.0, %v1026
  %v1028 = vpop.f32.mrb[0].mxu0
  %v1029 = vadd.f32 0.0, %v1028
  %v1030 = vpop.f32.mrb[0].mxu0
  %v1031 = vadd.f32 0.0, %v1030
  %v1032 = vpop.f32.mrb[0].mxu0
  %v1033 = vadd.f32 0.0, %v1032
  %1034 = vdwg.mxu0
  %v1035 = vadd.f32 %v940, %v984
  %v1036 = vadd.f32 %v941, %v986
  %v1037 = vadd.f32 %v942, %v1027
  %v1038 = vadd.f32 %v943, %v1029
  %v1039 = vadd.f32 %v944, %v988
  %v1040 = vadd.f32 %v945, %v990
  %v1041 = vadd.f32 %v946, %v1031
  %v1042 = vadd.f32 %v947, %v1033
  %v1043 = vxor.u32 %v1035, 2147483648
  %v1044 = vxor.u32 %v1039, 2147483648
  %v1045 = vmul.f32 %v1043, 1.442695
  %v1046 = vpow.pop %v1045
  %v1047 = vmul.f32 %v1044, 1.442695
  %v1048 = vpow.pop %v1047
  %v1049 = vadd.f32 %v1046, 1.0
  %v1050 = vadd.f32 %v1048, 1.0
  %v1051 = vrcp.pop %v1049
  %v1052 = vmul.f32 1.0, %v1051
  %v1053 = vrcp.pop %v1050
  %v1054 = vmul.f32 1.0, %v1053
  %v1055 = vxor.u32 %v1036, 2147483648
  %v1056 = vxor.u32 %v1040, 2147483648
  %v1057 = vmul.f32 %v1055, 1.442695
  %v1058 = vpow.pop %v1057
  %v1059 = vmul.f32 %v1056, 1.442695
  %v1060 = vpow.pop %v1059
  %v1061 = vadd.f32 %v1058, 1.0
  %v1062 = vadd.f32 %v1060, 1.0
  %v1063 = vrcp.pop %v1061
  %v1064 = vmul.f32 1.0, %v1063
  %v1065 = vrcp.pop %v1062
  %v1066 = vmul.f32 1.0, %v1065
  %v1067 = vtanh.pop %v1037
  %v1068 = vtanh.pop %v1041
  %v1069 = vxor.u32 %v1038, 2147483648
  %v1070 = vxor.u32 %v1042, 2147483648
  %v1071 = vmul.f32 %v1069, 1.442695
  %v1072 = vpow.pop %v1071
  %v1073 = vmul.f32 %v1070, 1.442695
  %v1074 = vpow.pop %v1073
  %v1075 = vadd.f32 %v1072, 1.0
  %v1076 = vadd.f32 %v1074, 1.0
  %v1077 = vrcp.pop %v1075
  %v1078 = vmul.f32 1.0, %v1077
  %v1079 = vrcp.pop %v1076
  %v1080 = vmul.f32 1.0, %v1079
  %v1081 = vmul.f32 %v1064, %v934
  %v1082 = vmul.f32 %v1066, %v935
  %v1083 = vmul.f32 %v1052, %v1067
  %v1084 = vmul.f32 %v1054, %v1068
  %v1085 = vadd.f32 %v1081, %v1083
  %v1086 = vadd.f32 %v1082, %v1084
  %v1087 = vtanh.pop %v1085
  %v1088 = vtanh.pop %v1086
  %v1089 = vmul.f32 %v1078, %v1087
  %v1090 = vmul.f32 %v1080, %v1088
  %v1091 = vld [vmem:[#allocation2 + $0xc0] sm:$0xff]
  %v1092 = vld [vmem:[#allocation2 + $0xc8] sm:$0xff]
  %v1093 = vld [vmem:[#allocation2 + $0xd0] sm:$0xff]
  %v1094 = vld [vmem:[#allocation2 + $0xd8] sm:$0xff]
  %v1095 = vld [vmem:[#allocation2 + $0xe0] sm:$0xff]
  %v1096 = vld [vmem:[#allocation2 + $0xe8] sm:$0xff]
  %v1097 = vld [vmem:[#allocation2 + $0xf0] sm:$0xff]
  %v1098 = vld [vmem:[#allocation2 + $0xf8] sm:$0xff]
  %v1099 = vpack.c.bf16 %v1090, %v1089
  %1100 = vmatprep.subr.bf16.mxu0 %v584
  %1101 = vmatpush1.bf16.msra.mxu0 %v583
  %1102 = vmatprep.subr.bf16.mxu0 %v588
  %1103 = vmatpush1.bf16.msra.mxu0 %v587
  %1104 = vmatprep.subr.bf16.mxu0 %v592
  %1105 = vmatpush1.bf16.msra.mxu0 %v591
  %1106 = vmatprep.subr.bf16.mxu0 %v596
  %1107 = vmatpush1.bf16.msra.mxu0 %v595
  %1108 = vmatprep.subr.bf16.mxu0 %v600
  %1109 = vmatpush1.bf16.msra.mxu0 %v599
  %1110 = vmatprep.subr.bf16.mxu0 %v604
  %1111 = vmatpush1.bf16.msra.mxu0 %v603
  %1112 = vmatprep.subr.bf16.mxu0 %v608
  %1113 = vmatpush1.bf16.msra.mxu0 %v607
  %1114 = vmatprep.subr.bf16.mxu0 %v612
  %1115 = vmatpush1.bf16.msra.mxu0 %v611
  %1116 = vmatprep.subr.bf16.mxu0 0
  %1117 = vmatpush1.bf16.msra.mxu0 0
  %1118 = vmatprep.subr.bf16.mxu0 0
  %1119 = vmatpush1.bf16.msra.mxu0 0
  %1120 = vmatprep.subr.bf16.mxu0 0
  %1121 = vmatpush1.bf16.msra.mxu0 0
  %1122 = vmatprep.subr.bf16.mxu0 0
  %1123 = vmatpush1.bf16.msra.mxu0 0
  %1124 = vmatprep.subr.bf16.mxu0 0
  %1125 = vmatpush1.bf16.msra.mxu0 0
  %1126 = vmatprep.subr.bf16.mxu0 0
  %1127 = vmatpush1.bf16.msra.mxu0 0
  %1128 = vmatprep.subr.bf16.mxu0 0
  %1129 = vmatpush1.bf16.msra.mxu0 0
  %1130 = vmatprep.subr.bf16.mxu0 0
  %1131 = vmatpush1.bf16.msra.mxu0 0
  %1132 = vmatprep.mubr.bf16.mxu0 0
  %1133 = vmatmul.mubr.bf16.gmra.mrb[0].mxu0 %v1099
  %v1134 = vpop.f32.mrb[0].mxu0
  %v1135 = vadd.f32 0.0, %v1134
  %v1136 = vpop.f32.mrb[0].mxu0
  %v1137 = vadd.f32 0.0, %v1136
  %v1138 = vpop.f32.mrb[0].mxu0
  %v1139 = vadd.f32 0.0, %v1138
  %v1140 = vpop.f32.mrb[0].mxu0
  %v1141 = vadd.f32 0.0, %v1140
  %1142 = vdwg.mxu0
  %1143 = vmatprep.subr.bf16.mxu0 %v586
  %1144 = vmatpush1.bf16.msra.mxu0 %v585
  %1145 = vmatprep.subr.bf16.mxu0 %v590
  %1146 = vmatpush1.bf16.msra.mxu0 %v589
  %1147 = vmatprep.subr.bf16.mxu0 %v594
  %1148 = vmatpush1.bf16.msra.mxu0 %v593
  %1149 = vmatprep.subr.bf16.mxu0 %v598
  %1150 = vmatpush1.bf16.msra.mxu0 %v597
  %1151 = vmatprep.subr.bf16.mxu0 %v602
  %1152 = vmatpush1.bf16.msra.mxu0 %v601
  %1153 = vmatprep.subr.bf16.mxu0 %v606
  %1154 = vmatpush1.bf16.msra.mxu0 %v605
  %1155 = vmatprep.subr.bf16.mxu0 %v610
  %1156 = vmatpush1.bf16.msra.mxu0 %v609
  %1157 = vmatprep.subr.bf16.mxu0 %v614
  %1158 = vmatpush1.bf16.msra.mxu0 %v613
  %1159 = vmatprep.subr.bf16.mxu0 0
  %1160 = vmatpush1.bf16.msra.mxu0 0
  %1161 = vmatprep.subr.bf16.mxu0 0
  %1162 = vmatpush1.bf16.msra.mxu0 0
  %1163 = vmatprep.subr.bf16.mxu0 0
  %1164 = vmatpush1.bf16.msra.mxu0 0
  %1165 = vmatprep.subr.bf16.mxu0 0
  %1166 = vmatpush1.bf16.msra.mxu0 0
  %1167 = vmatprep.subr.bf16.mxu0 0
  %1168 = vmatpush1.bf16.msra.mxu0 0
  %1169 = vmatprep.subr.bf16.mxu0 0
  %1170 = vmatpush1.bf16.msra.mxu0 0
  %1171 = vmatprep.subr.bf16.mxu0 0
  %1172 = vmatpush1.bf16.msra.mxu0 0
  %1173 = vmatprep.subr.bf16.mxu0 0
  %1174 = vmatpush1.bf16.msra.mxu0 0
  %1175 = vmatprep.mubr.bf16.mxu0 0
  %1176 = vmatmul.mubr.bf16.gmra.mrb[0].mxu0 %v1099
  %v1177 = vpop.f32.mrb[0].mxu0
  %v1178 = vadd.f32 0.0, %v1177
  %v1179 = vpop.f32.mrb[0].mxu0
  %v1180 = vadd.f32 0.0, %v1179
  %v1181 = vpop.f32.mrb[0].mxu0
  %v1182 = vadd.f32 0.0, %v1181
  %v1183 = vpop.f32.mrb[0].mxu0
  %v1184 = vadd.f32 0.0, %v1183
  %1185 = vdwg.mxu0
  %v1186 = vadd.f32 %v1091, %v1135
  %v1187 = vadd.f32 %v1092, %v1137
  %v1188 = vadd.f32 %v1093, %v1178
  %v1189 = vadd.f32 %v1094, %v1180
  %v1190 = vadd.f32 %v1095, %v1139
  %v1191 = vadd.f32 %v1096, %v1141
  %v1192 = vadd.f32 %v1097, %v1182
  %v1193 = vadd.f32 %v1098, %v1184
  %v1194 = vxor.u32 %v1186, 2147483648
  %v1195 = vxor.u32 %v1190, 2147483648
  %v1196 = vmul.f32 %v1194, 1.442695
  %v1197 = vpow.pop %v1196
  %v1198 = vmul.f32 %v1195, 1.442695
  %v1199 = vpow.pop %v1198
  %v1200 = vadd.f32 %v1197, 1.0
  %v1201 = vadd.f32 %v1199, 1.0
  %v1202 = vrcp.pop %v1200
  %v1203 = vmul.f32 1.0, %v1202
  %v1204 = vrcp.pop %v1201
  %v1205 = vmul.f32 1.0, %v1204
  %v1206 = vxor.u32 %v1187, 2147483648
  %v1207 = vxor.u32 %v1191, 2147483648
  %v1208 = vmul.f32 %v1206, 1.442695
  %v1209 = vpow.pop %v1208
  %v1210 = vmul.f32 %v1207, 1.442695
  %v1211 = vpow.pop %v1210
  %v1212 = vadd.f32 %v1209, 1.0
  %v1213 = vadd.f32 %v1211, 1.0
  %v1214 = vrcp.pop %v1212
  %v1215 = vmul.f32 1.0, %v1214
  %v1216 = vrcp.pop %v1213
  %v1217 = vmul.f32 1.0, %v1216
  %v1218 = vtanh.pop %v1188
  %v1219 = vtanh.pop %v1192
  %v1220 = vxor.u32 %v1189, 2147483648
  %v1221 = vxor.u32 %v1193, 2147483648
  %v1222 = vmul.f32 %v1220, 1.442695
  %v1223 = vpow.pop %v1222
  %v1224 = vmul.f32 %v1221, 1.442695
  %v1225 = vpow.pop %v1224
  %v1226 = vadd.f32 %v1223, 1.0
  %v1227 = vadd.f32 %v1225, 1.0
  %v1228 = vrcp.pop %v1226
  %v1229 = vmul.f32 1.0, %v1228
  %v1230 = vrcp.pop %v1227
  %v1231 = vmul.f32 1.0, %v1230
  %v1232 = vmul.f32 %v1215, %v1085
  %v1233 = vmul.f32 %v1217, %v1086
  %v1234 = vmul.f32 %v1203, %v1218
  %v1235 = vmul.f32 %v1205, %v1219
  %v1236 = vadd.f32 %v1232, %v1234
  %v1237 = vadd.f32 %v1233, %v1235
  %v1238 = vtanh.pop %v1236
  %v1239 = vtanh.pop %v1237
  %v1240 = vmul.f32 %v1229, %v1238
  %v1241 = vmul.f32 %v1231, %v1239
  %v1242 = vld [vmem:[#allocation2 + $0x100] sm:$0xff]
  %v1243 = vld [vmem:[#allocation2 + $0x108] sm:$0xff]
  %v1244 = vld [vmem:[#allocation2 + $0x110] sm:$0xff]
  %v1245 = vld [vmem:[#allocation2 + $0x118] sm:$0xff]
  %v1246 = vld [vmem:[#allocation2 + $0x120] sm:$0xff]
  %v1247 = vld [vmem:[#allocation2 + $0x128] sm:$0xff]
  %v1248 = vld [vmem:[#allocation2 + $0x130] sm:$0xff]
  %v1249 = vld [vmem:[#allocation2 + $0x138] sm:$0xff]
  %v1250 = vpack.c.bf16 %v1241, %v1240
  %1251 = vmatprep.subr.bf16.mxu0 %v584
  %1252 = vmatpush1.bf16.msra.mxu0 %v583
  %1253 = vmatprep.subr.bf16.mxu0 %v588
  %1254 = vmatpush1.bf16.msra.mxu0 %v587
  %1255 = vmatprep.subr.bf16.mxu0 %v592
  %1256 = vmatpush1.bf16.msra.mxu0 %v591
  %1257 = vmatprep.subr.bf16.mxu0 %v596
  %1258 = vmatpush1.bf16.msra.mxu0 %v595
  %1259 = vmatprep.subr.bf16.mxu0 %v600
  %1260 = vmatpush1.bf16.msra.mxu0 %v599
  %1261 = vmatprep.subr.bf16.mxu0 %v604
  %1262 = vmatpush1.bf16.msra.mxu0 %v603
  %1263 = vmatprep.subr.bf16.mxu0 %v608
  %1264 = vmatpush1.bf16.msra.mxu0 %v607
  %1265 = vmatprep.subr.bf16.mxu0 %v612
  %1266 = vmatpush1.bf16.msra.mxu0 %v611
  %1267 = vmatprep.subr.bf16.mxu0 0
  %1268 = vmatpush1.bf16.msra.mxu0 0
  %1269 = vmatprep.subr.bf16.mxu0 0
  %1270 = vmatpush1.bf16.msra.mxu0 0
  %1271 = vmatprep.subr.bf16.mxu0 0
  %1272 = vmatpush1.bf16.msra.mxu0 0
  %1273 = vmatprep.subr.bf16.mxu0 0
  %1274 = vmatpush1.bf16.msra.mxu0 0
  %1275 = vmatprep.subr.bf16.mxu0 0
  %1276 = vmatpush1.bf16.msra.mxu0 0
  %1277 = vmatprep.subr.bf16.mxu0 0
  %1278 = vmatpush1.bf16.msra.mxu0 0
  %1279 = vmatprep.subr.bf16.mxu0 0
  %1280 = vmatpush1.bf16.msra.mxu0 0
  %1281 = vmatprep.subr.bf16.mxu0 0
  %1282 = vmatpush1.bf16.msra.mxu0 0
  %1283 = vmatprep.mubr.bf16.mxu0 0
  %1284 = vmatmul.mubr.bf16.gmra.mrb[0].mxu0 %v1250
  %v1285 = vpop.f32.mrb[0].mxu0
  %v1286 = vadd.f32 0.0, %v1285
  %v1287 = vpop.f32.mrb[0].mxu0
  %v1288 = vadd.f32 0.0, %v1287
  %v1289 = vpop.f32.mrb[0].mxu0
  %v1290 = vadd.f32 0.0, %v1289
  %v1291 = vpop.f32.mrb[0].mxu0
  %v1292 = vadd.f32 0.0, %v1291
  %1293 = vdwg.mxu0
  %1294 = vmatprep.subr.bf16.mxu0 %v586
  %1295 = vmatpush1.bf16.msra.mxu0 %v585
  %1296 = vmatprep.subr.bf16.mxu0 %v590
  %1297 = vmatpush1.bf16.msra.mxu0 %v589
  %1298 = vmatprep.subr.bf16.mxu0 %v594
  %1299 = vmatpush1.bf16.msra.mxu0 %v593
  %1300 = vmatprep.subr.bf16.mxu0 %v598
  %1301 = vmatpush1.bf16.msra.mxu0 %v597
  %1302 = vmatprep.subr.bf16.mxu0 %v602
  %1303 = vmatpush1.bf16.msra.mxu0 %v601
  %1304 = vmatprep.subr.bf16.mxu0 %v606
  %1305 = vmatpush1.bf16.msra.mxu0 %v605
  %1306 = vmatprep.subr.bf16.mxu0 %v610
  %1307 = vmatpush1.bf16.msra.mxu0 %v609
  %1308 = vmatprep.subr.bf16.mxu0 %v614
  %1309 = vmatpush1.bf16.msra.mxu0 %v613
  %1310 = vmatprep.subr.bf16.mxu0 0
  %1311 = vmatpush1.bf16.msra.mxu0 0
  %1312 = vmatprep.subr.bf16.mxu0 0
  %1313 = vmatpush1.bf16.msra.mxu0 0
  %1314 = vmatprep.subr.bf16.mxu0 0
  %1315 = vmatpush1.bf16.msra.mxu0 0
  %1316 = vmatprep.subr.bf16.mxu0 0
  %1317 = vmatpush1.bf16.msra.mxu0 0
  %1318 = vmatprep.subr.bf16.mxu0 0
  %1319 = vmatpush1.bf16.msra.mxu0 0
  %1320 = vmatprep.subr.bf16.mxu0 0
  %1321 = vmatpush1.bf16.msra.mxu0 0
  %1322 = vmatprep.subr.bf16.mxu0 0
  %1323 = vmatpush1.bf16.msra.mxu0 0
  %1324 = vmatprep.subr.bf16.mxu0 0
  %1325 = vmatpush1.bf16.msra.mxu0 0
  %1326 = vmatprep.mubr.bf16.mxu0 0
  %1327 = vmatmul.mubr.bf16.gmra.mrb[0].mxu0 %v1250
  %v1328 = vpop.f32.mrb[0].mxu0
  %v1329 = vadd.f32 0.0, %v1328
  %v1330 = vpop.f32.mrb[0].mxu0
  %v1331 = vadd.f32 0.0, %v1330
  %v1332 = vpop.f32.mrb[0].mxu0
  %v1333 = vadd.f32 0.0, %v1332
  %v1334 = vpop.f32.mrb[0].mxu0
  %v1335 = vadd.f32 0.0, %v1334
  %1336 = vdwg.mxu0
  %v1337 = vadd.f32 %v1242, %v1286
  %v1338 = vadd.f32 %v1243, %v1288
  %v1339 = vadd.f32 %v1244, %v1329
  %v1340 = vadd.f32 %v1245, %v1331
  %v1341 = vadd.f32 %v1246, %v1290
  %v1342 = vadd.f32 %v1247, %v1292
  %v1343 = vadd.f32 %v1248, %v1333
  %v1344 = vadd.f32 %v1249, %v1335
  %v1345 = vxor.u32 %v1337, 2147483648
  %v1346 = vxor.u32 %v1341, 2147483648
  %v1347 = vmul.f32 %v1345, 1.442695
  %v1348 = vpow.pop %v1347
  %v1349 = vmul.f32 %v1346, 1.442695
  %v1350 = vpow.pop %v1349
  %v1351 = vadd.f32 %v1348, 1.0
  %v1352 = vadd.f32 %v1350, 1.0
  %v1353 = vrcp.pop %v1351
  %v1354 = vmul.f32 1.0, %v1353
  %v1355 = vrcp.pop %v1352
  %v1356 = vmul.f32 1.0, %v1355
  %v1357 = vxor.u32 %v1338, 2147483648
  %v1358 = vxor.u32 %v1342, 2147483648
  %v1359 = vmul.f32 %v1357, 1.442695
  %v1360 = vpow.pop %v1359
  %v1361 = vmul.f32 %v1358, 1.442695
  %v1362 = vpow.pop %v1361
  %v1363 = vadd.f32 %v1360, 1.0
  %v1364 = vadd.f32 %v1362, 1.0
  %v1365 = vrcp.pop %v1363
  %v1366 = vmul.f32 1.0, %v1365
  %v1367 = vrcp.pop %v1364
  %v1368 = vmul.f32 1.0, %v1367
  %v1369 = vtanh.pop %v1339
  %v1370 = vtanh.pop %v1343
  %v1371 = vxor.u32 %v1340, 2147483648
  %v1372 = vxor.u32 %v1344, 2147483648
  %v1373 = vmul.f32 %v1371, 1.442695
  %v1374 = vpow.pop %v1373
  %v1375 = vmul.f32 %v1372, 1.442695
  %v1376 = vpow.pop %v1375
  %v1377 = vadd.f32 %v1374, 1.0
  %v1378 = vadd.f32 %v1376, 1.0
  %v1379 = vrcp.pop %v1377
  %v1380 = vmul.f32 1.0, %v1379
  %v1381 = vrcp.pop %v1378
  %v1382 = vmul.f32 1.0, %v1381
  %v1383 = vmul.f32 %v1366, %v1236
  %v1384 = vmul.f32 %v1368, %v1237
  %v1385 = vmul.f32 %v1354, %v1369
  %v1386 = vmul.f32 %v1356, %v1370
  %v1387 = vadd.f32 %v1383, %v1385
  %v1388 = vadd.f32 %v1384, %v1386
  %v1389 = vtanh.pop %v1387
  %v1390 = vtanh.pop %v1388
  %v1391 = vmul.f32 %v1380, %v1389
  %v1392 = vmul.f32 %v1382, %v1390
  %v1393 = vld [vmem:[#allocation2 + $0x140] sm:$0xff]
  %v1394 = vld [vmem:[#allocation2 + $0x148] sm:$0xff]
  %v1395 = vld [vmem:[#allocation2 + $0x150] sm:$0xff]
  %v1396 = vld [vmem:[#allocation2 + $0x158] sm:$0xff]
  %v1397 = vld [vmem:[#allocation2 + $0x160] sm:$0xff]
  %v1398 = vld [vmem:[#allocation2 + $0x168] sm:$0xff]
  %v1399 = vld [vmem:[#allocation2 + $0x170] sm:$0xff]
  %v1400 = vld [vmem:[#allocation2 + $0x178] sm:$0xff]
  %v1401 = vpack.c.bf16 %v1392, %v1391
  %1402 = vmatprep.subr.bf16.mxu0 %v584
  %1403 = vmatpush1.bf16.msra.mxu0 %v583
  %1404 = vmatprep.subr.bf16.mxu0 %v588
  %1405 = vmatpush1.bf16.msra.mxu0 %v587
  %1406 = vmatprep.subr.bf16.mxu0 %v592
  %1407 = vmatpush1.bf16.msra.mxu0 %v591
  %1408 = vmatprep.subr.bf16.mxu0 %v596
  %1409 = vmatpush1.bf16.msra.mxu0 %v595
  %1410 = vmatprep.subr.bf16.mxu0 %v600
  %1411 = vmatpush1.bf16.msra.mxu0 %v599
  %1412 = vmatprep.subr.bf16.mxu0 %v604
  %1413 = vmatpush1.bf16.msra.mxu0 %v603
  %1414 = vmatprep.subr.bf16.mxu0 %v608
  %1415 = vmatpush1.bf16.msra.mxu0 %v607
  %1416 = vmatprep.subr.bf16.mxu0 %v612
  %1417 = vmatpush1.bf16.msra.mxu0 %v611
  %1418 = vmatprep.subr.bf16.mxu0 0
  %1419 = vmatpush1.bf16.msra.mxu0 0
  %1420 = vmatprep.subr.bf16.mxu0 0
  %1421 = vmatpush1.bf16.msra.mxu0 0
  %1422 = vmatprep.subr.bf16.mxu0 0
  %1423 = vmatpush1.bf16.msra.mxu0 0
  %1424 = vmatprep.subr.bf16.mxu0 0
  %1425 = vmatpush1.bf16.msra.mxu0 0
  %1426 = vmatprep.subr.bf16.mxu0 0
  %1427 = vmatpush1.bf16.msra.mxu0 0
  %1428 = vmatprep.subr.bf16.mxu0 0
  %1429 = vmatpush1.bf16.msra.mxu0 0
  %1430 = vmatprep.subr.bf16.mxu0 0
  %1431 = vmatpush1.bf16.msra.mxu0 0
  %1432 = vmatprep.subr.bf16.mxu0 0
  %1433 = vmatpush1.bf16.msra.mxu0 0
  %1434 = vmatprep.mubr.bf16.mxu0 0
  %1435 = vmatmul.mubr.bf16.gmra.mrb[0].mxu0 %v1401
  %v1436 = vpop.f32.mrb[0].mxu0
  %v1437 = vadd.f32 0.0, %v1436
  %v1438 = vpop.f32.mrb[0].mxu0
  %v1439 = vadd.f32 0.0, %v1438
  %v1440 = vpop.f32.mrb[0].mxu0
  %v1441 = vadd.f32 0.0, %v1440
  %v1442 = vpop.f32.mrb[0].mxu0
  %v1443 = vadd.f32 0.0, %v1442
  %1444 = vdwg.mxu0
  %1445 = vmatprep.subr.bf16.mxu0 %v586
  %1446 = vmatpush1.bf16.msra.mxu0 %v585
  %1447 = vmatprep.subr.bf16.mxu0 %v590
  %1448 = vmatpush1.bf16.msra.mxu0 %v589
  %1449 = vmatprep.subr.bf16.mxu0 %v594
  %1450 = vmatpush1.bf16.msra.mxu0 %v593
  %1451 = vmatprep.subr.bf16.mxu0 %v598
  %1452 = vmatpush1.bf16.msra.mxu0 %v597
  %1453 = vmatprep.subr.bf16.mxu0 %v602
  %1454 = vmatpush1.bf16.msra.mxu0 %v601
  %1455 = vmatprep.subr.bf16.mxu0 %v606
  %1456 = vmatpush1.bf16.msra.mxu0 %v605
  %1457 = vmatprep.subr.bf16.mxu0 %v610
  %1458 = vmatpush1.bf16.msra.mxu0 %v609
  %1459 = vmatprep.subr.bf16.mxu0 %v614
  %1460 = vmatpush1.bf16.msra.mxu0 %v613
  %1461 = vmatprep.subr.bf16.mxu0 0
  %1462 = vmatpush1.bf16.msra.mxu0 0
  %1463 = vmatprep.subr.bf16.mxu0 0
  %1464 = vmatpush1.bf16.msra.mxu0 0
  %1465 = vmatprep.subr.bf16.mxu0 0
  %1466 = vmatpush1.bf16.msra.mxu0 0
  %1467 = vmatprep.subr.bf16.mxu0 0
  %1468 = vmatpush1.bf16.msra.mxu0 0
  %1469 = vmatprep.subr.bf16.mxu0 0
  %1470 = vmatpush1.bf16.msra.mxu0 0
  %1471 = vmatprep.subr.bf16.mxu0 0
  %1472 = vmatpush1.bf16.msra.mxu0 0
  %1473 = vmatprep.subr.bf16.mxu0 0
  %1474 = vmatpush1.bf16.msra.mxu0 0
  %1475 = vmatprep.subr.bf16.mxu0 0
  %1476 = vmatpush1.bf16.msra.mxu0 0
  %1477 = vmatprep.mubr.bf16.mxu0 0
  %1478 = vmatmul.mubr.bf16.gmra.mrb[0].mxu0 %v1401
  %v1479 = vpop.f32.mrb[0].mxu0
  %v1480 = vadd.f32 0.0, %v1479
  %v1481 = vpop.f32.mrb[0].mxu0
  %v1482 = vadd.f32 0.0, %v1481
  %v1483 = vpop.f32.mrb[0].mxu0
  %v1484 = vadd.f32 0.0, %v1483
  %v1485 = vpop.f32.mrb[0].mxu0
  %v1486 = vadd.f32 0.0, %v1485
  %1487 = vdwg.mxu0
  %v1488 = vadd.f32 %v1393, %v1437
  %v1489 = vadd.f32 %v1394, %v1439
  %v1490 = vadd.f32 %v1395, %v1480
  %v1491 = vadd.f32 %v1396, %v1482
  %v1492 = vadd.f32 %v1397, %v1441
  %v1493 = vadd.f32 %v1398, %v1443
  %v1494 = vadd.f32 %v1399, %v1484
  %v1495 = vadd.f32 %v1400, %v1486
  %v1496 = vxor.u32 %v1488, 2147483648
  %v1497 = vxor.u32 %v1492, 2147483648
  %v1498 = vmul.f32 %v1496, 1.442695
  %v1499 = vpow.pop %v1498
  %v1500 = vmul.f32 %v1497, 1.442695
  %v1501 = vpow.pop %v1500
  %v1502 = vadd.f32 %v1499, 1.0
  %v1503 = vadd.f32 %v1501, 1.0
  %v1504 = vrcp.pop %v1502
  %v1505 = vmul.f32 1.0, %v1504
  %v1506 = vrcp.pop %v1503
  %v1507 = vmul.f32 1.0, %v1506
  %v1508 = vxor.u32 %v1489, 2147483648
  %v1509 = vxor.u32 %v1493, 2147483648
  %v1510 = vmul.f32 %v1508, 1.442695
  %v1511 = vpow.pop %v1510
  %v1512 = vmul.f32 %v1509, 1.442695
  %v1513 = vpow.pop %v1512
  %v1514 = vadd.f32 %v1511, 1.0
  %v1515 = vadd.f32 %v1513, 1.0
  %v1516 = vrcp.pop %v1514
  %v1517 = vmul.f32 1.0, %v1516
  %v1518 = vrcp.pop %v1515
  %v1519 = vmul.f32 1.0, %v1518
  %v1520 = vtanh.pop %v1490
  %v1521 = vtanh.pop %v1494
  %v1522 = vxor.u32 %v1491, 2147483648
  %v1523 = vxor.u32 %v1495, 2147483648
  %v1524 = vmul.f32 %v1522, 1.442695
  %v1525 = vpow.pop %v1524
  %v1526 = vmul.f32 %v1523, 1.442695
  %v1527 = vpow.pop %v1526
  %v1528 = vadd.f32 %v1525, 1.0
  %v1529 = vadd.f32 %v1527, 1.0
  %v1530 = vrcp.pop %v1528
  %v1531 = vmul.f32 1.0, %v1530
  %v1532 = vrcp.pop %v1529
  %v1533 = vmul.f32 1.0, %v1532
  %v1534 = vmul.f32 %v1517, %v1387
  %v1535 = vmul.f32 %v1519, %v1388
  %v1536 = vmul.f32 %v1505, %v1520
  %v1537 = vmul.f32 %v1507, %v1521
  %v1538 = vadd.f32 %v1534, %v1536
  %v1539 = vadd.f32 %v1535, %v1537
  %v1540 = vtanh.pop %v1538
  %v1541 = vtanh.pop %v1539
  %v1542 = vmul.f32 %v1531, %v1540
  %v1543 = vmul.f32 %v1533, %v1541
  %v1544 = vld [vmem:[#allocation2 + $0x180] sm:$0xff]
  %v1545 = vld [vmem:[#allocation2 + $0x188] sm:$0xff]
  %v1546 = vld [vmem:[#allocation2 + $0x190] sm:$0xff]
  %v1547 = vld [vmem:[#allocation2 + $0x198] sm:$0xff]
  %v1548 = vld [vmem:[#allocation2 + $0x1a0] sm:$0xff]
  %v1549 = vld [vmem:[#allocation2 + $0x1a8] sm:$0xff]
  %v1550 = vld [vmem:[#allocation2 + $0x1b0] sm:$0xff]
  %v1551 = vld [vmem:[#allocation2 + $0x1b8] sm:$0xff]
  %v1552 = vpack.c.bf16 %v1543, %v1542
  %1553 = vmatprep.subr.bf16.mxu0 %v584
  %1554 = vmatpush1.bf16.msra.mxu0 %v583
  %1555 = vmatprep.subr.bf16.mxu0 %v588
  %1556 = vmatpush1.bf16.msra.mxu0 %v587
  %1557 = vmatprep.subr.bf16.mxu0 %v592
  %1558 = vmatpush1.bf16.msra.mxu0 %v591
  %1559 = vmatprep.subr.bf16.mxu0 %v596
  %1560 = vmatpush1.bf16.msra.mxu0 %v595
  %1561 = vmatprep.subr.bf16.mxu0 %v600
  %1562 = vmatpush1.bf16.msra.mxu0 %v599
  %1563 = vmatprep.subr.bf16.mxu0 %v604
  %1564 = vmatpush1.bf16.msra.mxu0 %v603
  %1565 = vmatprep.subr.bf16.mxu0 %v608
  %1566 = vmatpush1.bf16.msra.mxu0 %v607
  %1567 = vmatprep.subr.bf16.mxu0 %v612
  %1568 = vmatpush1.bf16.msra.mxu0 %v611
  %1569 = vmatprep.subr.bf16.mxu0 0
  %1570 = vmatpush1.bf16.msra.mxu0 0
  %1571 = vmatprep.subr.bf16.mxu0 0
  %1572 = vmatpush1.bf16.msra.mxu0 0
  %1573 = vmatprep.subr.bf16.mxu0 0
  %1574 = vmatpush1.bf16.msra.mxu0 0
  %1575 = vmatprep.subr.bf16.mxu0 0
  %1576 = vmatpush1.bf16.msra.mxu0 0
  %1577 = vmatprep.subr.bf16.mxu0 0
  %1578 = vmatpush1.bf16.msra.mxu0 0
  %1579 = vmatprep.subr.bf16.mxu0 0
  %1580 = vmatpush1.bf16.msra.mxu0 0
  %1581 = vmatprep.subr.bf16.mxu0 0
  %1582 = vmatpush1.bf16.msra.mxu0 0
  %1583 = vmatprep.subr.bf16.mxu0 0
  %1584 = vmatpush1.bf16.msra.mxu0 0
  %1585 = vmatprep.mubr.bf16.mxu0 0
  %1586 = vmatmul.mubr.bf16.gmra.mrb[0].mxu0 %v1552
  %v1587 = vpop.f32.mrb[0].mxu0
  %v1588 = vadd.f32 0.0, %v1587
  %v1589 = vpop.f32.mrb[0].mxu0
  %v1590 = vadd.f32 0.0, %v1589
  %v1591 = vpop.f32.mrb[0].mxu0
  %v1592 = vadd.f32 0.0, %v1591
  %v1593 = vpop.f32.mrb[0].mxu0
  %v1594 = vadd.f32 0.0, %v1593
  %1595 = vdwg.mxu0
  %1596 = vmatprep.subr.bf16.mxu0 %v586
  %1597 = vmatpush1.bf16.msra.mxu0 %v585
  %1598 = vmatprep.subr.bf16.mxu0 %v590
  %1599 = vmatpush1.bf16.msra.mxu0 %v589
  %1600 = vmatprep.subr.bf16.mxu0 %v594
  %1601 = vmatpush1.bf16.msra.mxu0 %v593
  %1602 = vmatprep.subr.bf16.mxu0 %v598
  %1603 = vmatpush1.bf16.msra.mxu0 %v597
  %1604 = vmatprep.subr.bf16.mxu0 %v602
  %1605 = vmatpush1.bf16.msra.mxu0 %v601
  %1606 = vmatprep.subr.bf16.mxu0 %v606
  %1607 = vmatpush1.bf16.msra.mxu0 %v605
  %1608 = vmatprep.subr.bf16.mxu0 %v610
  %1609 = vmatpush1.bf16.msra.mxu0 %v609
  %1610 = vmatprep.subr.bf16.mxu0 %v614
  %1611 = vmatpush1.bf16.msra.mxu0 %v613
  %1612 = vmatprep.subr.bf16.mxu0 0
  %1613 = vmatpush1.bf16.msra.mxu0 0
  %1614 = vmatprep.subr.bf16.mxu0 0
  %1615 = vmatpush1.bf16.msra.mxu0 0
  %1616 = vmatprep.subr.bf16.mxu0 0
  %1617 = vmatpush1.bf16.msra.mxu0 0
  %1618 = vmatprep.subr.bf16.mxu0 0
  %1619 = vmatpush1.bf16.msra.mxu0 0
  %1620 = vmatprep.subr.bf16.mxu0 0
  %1621 = vmatpush1.bf16.msra.mxu0 0
  %1622 = vmatprep.subr.bf16.mxu0 0
  %1623 = vmatpush1.bf16.msra.mxu0 0
  %1624 = vmatprep.subr.bf16.mxu0 0
  %1625 = vmatpush1.bf16.msra.mxu0 0
  %1626 = vmatprep.subr.bf16.mxu0 0
  %1627 = vmatpush1.bf16.msra.mxu0 0
  %1628 = vmatprep.mubr.bf16.mxu0 0
  %1629 = vmatmul.mubr.bf16.gmra.mrb[0].mxu0 %v1552
  %v1630 = vpop.f32.mrb[0].mxu0
  %v1631 = vadd.f32 0.0, %v1630
  %v1632 = vpop.f32.mrb[0].mxu0
  %v1633 = vadd.f32 0.0, %v1632
  %v1634 = vpop.f32.mrb[0].mxu0
  %v1635 = vadd.f32 0.0, %v1634
  %v1636 = vpop.f32.mrb[0].mxu0
  %v1637 = vadd.f32 0.0, %v1636
  %1638 = vdwg.mxu0
  %v1639 = vadd.f32 %v1544, %v1588
  %v1640 = vadd.f32 %v1545, %v1590
  %v1641 = vadd.f32 %v1546, %v1631
  %v1642 = vadd.f32 %v1547, %v1633
  %v1643 = vadd.f32 %v1548, %v1592
  %v1644 = vadd.f32 %v1549, %v1594
  %v1645 = vadd.f32 %v1550, %v1635
  %v1646 = vadd.f32 %v1551, %v1637
  %v1647 = vxor.u32 %v1639, 2147483648
  %v1648 = vxor.u32 %v1643, 2147483648
  %v1649 = vmul.f32 %v1647, 1.442695
  %v1650 = vpow.pop %v1649
  %v1651 = vmul.f32 %v1648, 1.442695
  %v1652 = vpow.pop %v1651
  %v1653 = vadd.f32 %v1650, 1.0
  %v1654 = vadd.f32 %v1652, 1.0
  %v1655 = vrcp.pop %v1653
  %v1656 = vmul.f32 1.0, %v1655
  %v1657 = vrcp.pop %v1654
  %v1658 = vmul.f32 1.0, %v1657
  %v1659 = vxor.u32 %v1640, 2147483648
  %v1660 = vxor.u32 %v1644, 2147483648
  %v1661 = vmul.f32 %v1659, 1.442695
  %v1662 = vpow.pop %v1661
  %v1663 = vmul.f32 %v1660, 1.442695
  %v1664 = vpow.pop %v1663
  %v1665 = vadd.f32 %v1662, 1.0
  %v1666 = vadd.f32 %v1664, 1.0
  %v1667 = vrcp.pop %v1665
  %v1668 = vmul.f32 1.0, %v1667
  %v1669 = vrcp.pop %v1666
  %v1670 = vmul.f32 1.0, %v1669
  %v1671 = vtanh.pop %v1641
  %v1672 = vtanh.pop %v1645
  %v1673 = vxor.u32 %v1642, 2147483648
  %v1674 = vxor.u32 %v1646, 2147483648
  %v1675 = vmul.f32 %v1673, 1.442695
  %v1676 = vpow.pop %v1675
  %v1677 = vmul.f32 %v1674, 1.442695
  %v1678 = vpow.pop %v1677
  %v1679 = vadd.f32 %v1676, 1.0
  %v1680 = vadd.f32 %v1678, 1.0
  %v1681 = vrcp.pop %v1679
  %v1682 = vmul.f32 1.0, %v1681
  %v1683 = vrcp.pop %v1680
  %v1684 = vmul.f32 1.0, %v1683
  %v1685 = vmul.f32 %v1668, %v1538
  %v1686 = vmul.f32 %v1670, %v1539
  %v1687 = vmul.f32 %v1656, %v1671
  %v1688 = vmul.f32 %v1658, %v1672
  %v1689 = vadd.f32 %v1685, %v1687
  %v1690 = vadd.f32 %v1686, %v1688
  %v1691 = vtanh.pop %v1689
  %v1692 = vtanh.pop %v1690
  %v1693 = vmul.f32 %v1682, %v1691
  %v1694 = vmul.f32 %v1684, %v1692
  %v1695 = vld [vmem:[#allocation2 + $0x1c0] sm:$0xff]
  %v1696 = vld [vmem:[#allocation2 + $0x1c8] sm:$0xff]
  %v1697 = vld [vmem:[#allocation2 + $0x1d0] sm:$0xff]
  %v1698 = vld [vmem:[#allocation2 + $0x1d8] sm:$0xff]
  %v1699 = vld [vmem:[#allocation2 + $0x1e0] sm:$0xff]
  %v1700 = vld [vmem:[#allocation2 + $0x1e8] sm:$0xff]
  %v1701 = vld [vmem:[#allocation2 + $0x1f0] sm:$0xff]
  %v1702 = vld [vmem:[#allocation2 + $0x1f8] sm:$0xff]
  %v1703 = vpack.c.bf16 %v1694, %v1693
  %1704 = vmatprep.subr.bf16.mxu0 %v584
  %1705 = vmatpush1.bf16.msra.mxu0 %v583
  %1706 = vmatprep.subr.bf16.mxu0 %v588
  %1707 = vmatpush1.bf16.msra.mxu0 %v587
  %1708 = vmatprep.subr.bf16.mxu0 %v592
  %1709 = vmatpush1.bf16.msra.mxu0 %v591
  %1710 = vmatprep.subr.bf16.mxu0 %v596
  %1711 = vmatpush1.bf16.msra.mxu0 %v595
  %1712 = vmatprep.subr.bf16.mxu0 %v600
  %1713 = vmatpush1.bf16.msra.mxu0 %v599
  %1714 = vmatprep.subr.bf16.mxu0 %v604
  %1715 = vmatpush1.bf16.msra.mxu0 %v603
  %1716 = vmatprep.subr.bf16.mxu0 %v608
  %1717 = vmatpush1.bf16.msra.mxu0 %v607
  %1718 = vmatprep.subr.bf16.mxu0 %v612
  %1719 = vmatpush1.bf16.msra.mxu0 %v611
  %1720 = vmatprep.subr.bf16.mxu0 0
  %1721 = vmatpush1.bf16.msra.mxu0 0
  %1722 = vmatprep.subr.bf16.mxu0 0
  %1723 = vmatpush1.bf16.msra.mxu0 0
  %1724 = vmatprep.subr.bf16.mxu0 0
  %1725 = vmatpush1.bf16.msra.mxu0 0
  %1726 = vmatprep.subr.bf16.mxu0 0
  %1727 = vmatpush1.bf16.msra.mxu0 0
  %1728 = vmatprep.subr.bf16.mxu0 0
  %1729 = vmatpush1.bf16.msra.mxu0 0
  %1730 = vmatprep.subr.bf16.mxu0 0
  %1731 = vmatpush1.bf16.msra.mxu0 0
  %1732 = vmatprep.subr.bf16.mxu0 0
  %1733 = vmatpush1.bf16.msra.mxu0 0
  %1734 = vmatprep.subr.bf16.mxu0 0
  %1735 = vmatpush1.bf16.msra.mxu0 0
  %1736 = vmatprep.mubr.bf16.mxu0 0
  %1737 = vmatmul.mubr.bf16.gmra.mrb[0].mxu0 %v1703
  %v1738 = vpop.f32.mrb[0].mxu0
  %v1739 = vadd.f32 0.0, %v1738
  %v1740 = vpop.f32.mrb[0].mxu0
  %v1741 = vadd.f32 0.0, %v1740
  %v1742 = vpop.f32.mrb[0].mxu0
  %v1743 = vadd.f32 0.0, %v1742
  %v1744 = vpop.f32.mrb[0].mxu0
  %v1745 = vadd.f32 0.0, %v1744
  %1746 = vdwg.mxu0
  %1747 = vmatprep.subr.bf16.mxu0 %v586
  %1748 = vmatpush1.bf16.msra.mxu0 %v585
  %1749 = vmatprep.subr.bf16.mxu0 %v590
  %1750 = vmatpush1.bf16.msra.mxu0 %v589
  %1751 = vmatprep.subr.bf16.mxu0 %v594
  %1752 = vmatpush1.bf16.msra.mxu0 %v593
  %1753 = vmatprep.subr.bf16.mxu0 %v598
  %1754 = vmatpush1.bf16.msra.mxu0 %v597
  %1755 = vmatprep.subr.bf16.mxu0 %v602
  %1756 = vmatpush1.bf16.msra.mxu0 %v601
  %1757 = vmatprep.subr.bf16.mxu0 %v606
  %1758 = vmatpush1.bf16.msra.mxu0 %v605
  %1759 = vmatprep.subr.bf16.mxu0 %v610
  %1760 = vmatpush1.bf16.msra.mxu0 %v609
  %1761 = vmatprep.subr.bf16.mxu0 %v614
  %1762 = vmatpush1.bf16.msra.mxu0 %v613
  %1763 = vmatprep.subr.bf16.mxu0 0
  %1764 = vmatpush1.bf16.msra.mxu0 0
  %1765 = vmatprep.subr.bf16.mxu0 0
  %1766 = vmatpush1.bf16.msra.mxu0 0
  %1767 = vmatprep.subr.bf16.mxu0 0
  %1768 = vmatpush1.bf16.msra.mxu0 0
  %1769 = vmatprep.subr.bf16.mxu0 0
  %1770 = vmatpush1.bf16.msra.mxu0 0
  %1771 = vmatprep.subr.bf16.mxu0 0
  %1772 = vmatpush1.bf16.msra.mxu0 0
  %1773 = vmatprep.subr.bf16.mxu0 0
  %1774 = vmatpush1.bf16.msra.mxu0 0
  %1775 = vmatprep.subr.bf16.mxu0 0
  %1776 = vmatpush1.bf16.msra.mxu0 0
  %1777 = vmatprep.subr.bf16.mxu0 0
  %1778 = vmatpush1.bf16.msra.mxu0 0
  %1779 = vmatprep.mubr.bf16.mxu0 0
  %1780 = vmatmul.mubr.bf16.gmra.mrb[0].mxu0 %v1703
  %v1781 = vpop.f32.mrb[0].mxu0
  %v1782 = vadd.f32 0.0, %v1781
  %v1783 = vpop.f32.mrb[0].mxu0
  %v1784 = vadd.f32 0.0, %v1783
  %v1785 = vpop.f32.mrb[0].mxu0
  %v1786 = vadd.f32 0.0, %v1785
  %v1787 = vpop.f32.mrb[0].mxu0
  %v1788 = vadd.f32 0.0, %v1787
  %1789 = vdwg.mxu0
  %v1790 = vadd.f32 %v1695, %v1739
  %v1791 = vadd.f32 %v1696, %v1741
  %v1792 = vadd.f32 %v1697, %v1782
  %v1793 = vadd.f32 %v1698, %v1784
  %v1794 = vadd.f32 %v1699, %v1743
  %v1795 = vadd.f32 %v1700, %v1745
  %v1796 = vadd.f32 %v1701, %v1786
  %v1797 = vadd.f32 %v1702, %v1788
  %v1798 = vxor.u32 %v1790, 2147483648
  %v1799 = vxor.u32 %v1794, 2147483648
  %v1800 = vmul.f32 %v1798, 1.442695
  %v1801 = vpow.pop %v1800
  %v1802 = vmul.f32 %v1799, 1.442695
  %v1803 = vpow.pop %v1802
  %v1804 = vadd.f32 %v1801, 1.0
  %v1805 = vadd.f32 %v1803, 1.0
  %v1806 = vrcp.pop %v1804
  %v1807 = vmul.f32 1.0, %v1806
  %v1808 = vrcp.pop %v1805
  %v1809 = vmul.f32 1.0, %v1808
  %v1810 = vxor.u32 %v1791, 2147483648
  %v1811 = vxor.u32 %v1795, 2147483648
  %v1812 = vmul.f32 %v1810, 1.442695
  %v1813 = vpow.pop %v1812
  %v1814 = vmul.f32 %v1811, 1.442695
  %v1815 = vpow.pop %v1814
  %v1816 = vadd.f32 %v1813, 1.0
  %v1817 = vadd.f32 %v1815, 1.0
  %v1818 = vrcp.pop %v1816
  %v1819 = vmul.f32 1.0, %v1818
  %v1820 = vrcp.pop %v1817
  %v1821 = vmul.f32 1.0, %v1820
  %v1822 = vtanh.pop %v1792
  %v1823 = vtanh.pop %v1796
  %v1824 = vxor.u32 %v1793, 2147483648
  %v1825 = vxor.u32 %v1797, 2147483648
  %v1826 = vmul.f32 %v1824, 1.442695
  %v1827 = vpow.pop %v1826
  %v1828 = vmul.f32 %v1825, 1.442695
  %v1829 = vpow.pop %v1828
  %v1830 = vadd.f32 %v1827, 1.0
  %v1831 = vadd.f32 %v1829, 1.0
  %v1832 = vrcp.pop %v1830
  %v1833 = vmul.f32 1.0, %v1832
  %v1834 = vrcp.pop %v1831
  %v1835 = vmul.f32 1.0, %v1834
  %v1836 = vmul.f32 %v1819, %v1689
  %v1837 = vmul.f32 %v1821, %v1690
  %v1838 = vmul.f32 %v1807, %v1822
  %v1839 = vmul.f32 %v1809, %v1823
  %v1840 = vadd.f32 %v1836, %v1838
  %v1841 = vadd.f32 %v1837, %v1839
  %v1842 = vtanh.pop %v1840
  %v1843 = vtanh.pop %v1841
  %v1844 = vmul.f32 %v1833, %v1842
  %v1845 = vmul.f32 %v1835, %v1843
  %1846 = vadd.xlane.f32.xlu0 %v1844
  %v1847 = vpop.xlane.xlu0 %1846
  %1848 = vadd.xlane.f32.xlu0 %v1845
  %v1849 = vpop.xlane.xlu0 %1848
  %v1850 = vrcp.pop 128.0
  %v1851 = vmul.f32 %v1847, %v1850
  %v1852 = vmul.f32 %v1849, %v1850
  %v1853 = vsub.f32 %v1844, %v1851
  %v1854 = vsub.f32 %v1845, %v1852
  %v1855 = vmul.f32 %v1853, %v1853
  %v1856 = vmul.f32 %v1854, %v1854
  %1857 = vadd.xlane.f32.xlu0 %v1855
  %v1858 = vpop.xlane.xlu0 %1857
  %1859 = vadd.xlane.f32.xlu0 %v1856
  %v1860 = vpop.xlane.xlu0 %1859
  %v1861 = vmul.f32 %v1858, %v1850
  %v1862 = vmul.f32 %v1860, %v1850
  %v1863 = vadd.f32 %v1861, 1e-05
  %v1864 = vadd.f32 %v1862, 1e-05
  %v1865 = vrsqrt.pop %v1863
  %v1866 = vrsqrt.pop %v1864
  %v1867 = vmul.f32 %v1853, %v1865
  %v1868 = vmul.f32 %v1854, %v1866
  %v1869 = vld [vmem:[%s4] sm:$0x1]
  %v1871 = vlaneseq
  %v1872 = vshrl.u32 %v1871, 7
  %v1873 = vsub.s32 0, %v1872
  %v1874 = vrot.slane %v1869, %v1873
  %v1876 = vmul.f32 %v1867, %v1874
  %v1877 = vmul.f32 %v1868, %v1874
  %v1878 = vld [vmem:[%s5] sm:$0x1]
  %v1880 = vlaneseq
  %v1881 = vshrl.u32 %v1880, 7
  %v1882 = vsub.s32 0, %v1881
  %v1883 = vrot.slane %v1878, %v1882
  %v1885 = vadd.f32 %v1876, %v1883
  %v1886 = vadd.f32 %v1877, %v1883
  %v1887 = vmax.f32 %v1885, 0.0
  %v1888 = vmax.f32 %v1886, 0.0
  %v1889 = vpack.c.bf16 %v1888, %v1887
  %v1890 = vld [vmem:[%s6] sm:$0xf]
  %v1891 = vld [vmem:[%s6 + $0x4] sm:$0xf]
  %v1892 = vld [vmem:[%s6 + $0x8] sm:$0xf]
  %v1893 = vld [vmem:[%s6 + $0xc] sm:$0xf]
  %v1894 = vld [vmem:[%s6 + $0x10] sm:$0xf]
  %v1895 = vld [vmem:[%s6 + $0x14] sm:$0xf]
  %v1896 = vld [vmem:[%s6 + $0x18] sm:$0xf]
  %v1897 = vld [vmem:[%s6 + $0x1c] sm:$0xf]
  %v1898 = vld [vmem:[%s6 + $0x20] sm:$0xf]
  %v1899 = vld [vmem:[%s6 + $0x24] sm:$0xf]
  %v1900 = vld [vmem:[%s6 + $0x28] sm:$0xf]
  %v1901 = vld [vmem:[%s6 + $0x2c] sm:$0xf]
  %v1902 = vld [vmem:[%s6 + $0x30] sm:$0xf]
  %v1903 = vld [vmem:[%s6 + $0x34] sm:$0xf]
  %v1904 = vld [vmem:[%s6 + $0x38] sm:$0xf]
  %v1905 = vld [vmem:[%s6 + $0x3c] sm:$0xf]
  %v1906 = vld [vmem:[%s7] sm:$0x1]
  %v1908 = vlaneseq
  %v1909 = vshrl.u32 %v1908, 7
  %v1910 = vsub.s32 0, %v1909
  %v1911 = vrot.slane %v1906, %v1910
  %v1929 = vunpack.c.l.b16 %v1890
  %v1930 = vunpack.c.l.b16 %v1891
  %v1931 = vunpack.c.l.b16 %v1892
  %v1932 = vunpack.c.l.b16 %v1893
  %v1933 = vunpack.c.l.b16 %v1894
  %v1934 = vunpack.c.l.b16 %v1895
  %v1935 = vunpack.c.l.b16 %v1896
  %v1936 = vunpack.c.l.b16 %v1897
  %v1937 = vunpack.c.l.b16 %v1898
  %v1938 = vunpack.c.l.b16 %v1899
  %v1939 = vunpack.c.l.b16 %v1900
  %v1940 = vunpack.c.l.b16 %v1901
  %v1941 = vunpack.c.l.b16 %v1902
  %v1942 = vunpack.c.l.b16 %v1903
  %v1943 = vunpack.c.l.b16 %v1904
  %v1944 = vunpack.c.l.b16 %v1905
  %v1945 = vpack.c.b16 %v1930, %v1929
  %v1946 = vpack.c.b16 %v1932, %v1931
  %v1947 = vpack.c.b16 %v1934, %v1933
  %v1948 = vpack.c.b16 %v1936, %v1935
  %v1949 = vpack.c.b16 %v1938, %v1937
  %v1950 = vpack.c.b16 %v1940, %v1939
  %v1951 = vpack.c.b16 %v1942, %v1941
  %v1952 = vpack.c.b16 %v1944, %v1943
  %1961 = vmatprep.subr.bf16.mxu0 0
  %1962 = vmatpush1.bf16.msra.mxu0 %v1945
  %1963 = vmatprep.subr.bf16.mxu0 0
  %1964 = vmatpush1.bf16.msra.mxu0 %v1946
  %1965 = vmatprep.subr.bf16.mxu0 0
  %1966 = vmatpush1.bf16.msra.mxu0 %v1947
  %1967 = vmatprep.subr.bf16.mxu0 0
  %1968 = vmatpush1.bf16.msra.mxu0 %v1948
  %1969 = vmatprep.subr.bf16.mxu0 0
  %1970 = vmatpush1.bf16.msra.mxu0 %v1949
  %1971 = vmatprep.subr.bf16.mxu0 0
  %1972 = vmatpush1.bf16.msra.mxu0 %v1950
  %1973 = vmatprep.subr.bf16.mxu0 0
  %1974 = vmatpush1.bf16.msra.mxu0 %v1951
  %1975 = vmatprep.subr.bf16.mxu0 0
  %1976 = vmatpush1.bf16.msra.mxu0 %v1952
  %1977 = vmatprep.subr.bf16.mxu0 0
  %1978 = vmatpush1.bf16.msra.mxu0 0
  %1979 = vmatprep.subr.bf16.mxu0 0
  %1980 = vmatpush1.bf16.msra.mxu0 0
  %1981 = vmatprep.subr.bf16.mxu0 0
  %1982 = vmatpush1.bf16.msra.mxu0 0
  %1983 = vmatprep.subr.bf16.mxu0 0
  %1984 = vmatpush1.bf16.msra.mxu0 0
  %1985 = vmatprep.subr.bf16.mxu0 0
  %1986 = vmatpush1.bf16.msra.mxu0 0
  %1987 = vmatprep.subr.bf16.mxu0 0
  %1988 = vmatpush1.bf16.msra.mxu0 0
  %1989 = vmatprep.subr.bf16.mxu0 0
  %1990 = vmatpush1.bf16.msra.mxu0 0
  %1991 = vmatprep.subr.bf16.mxu0 0
  %1992 = vmatpush1.bf16.msra.mxu0 0
  %1993 = vmatprep.mubr.bf16.mxu0 0
  %1994 = vmatmul.mubr.bf16.gmra.mrb[0].mxu0 %v1889
  %v1995 = vpop.f32.mrb[0].mxu0
  %v1996 = vadd.f32 %v1911, %v1995
  %v1997 = vpop.f32.mrb[0].mxu0
  %v1998 = vpop.f32.mrb[0].mxu0
  %v1999 = vadd.f32 %v1911, %v1998
  %v2000 = vpop.f32.mrb[0].mxu0
  %2001 = vdwg.mxu0
  %2002 = vst [vmem:[%s8] sm:$0xff] %v1996
  %2003 = vst [vmem:[%s8 + $0x8] sm:$0xff] %v1999
  // Predicated region
  $region34: #{eye_state_lstm_128.1} parent=0 // pred_check
    _
  $region35: #{eye_state_lstm_128.1} parent=0 // pred_check_branch
    %2005 = sbr.rel (0) target = $region37
  $region36: #{eye_state_lstm_128.1} parent=0 // pred_region
    _
  $region37: #{eye_state_lstm_128.1} parent=0 // pred_fallthru
    _
  // Predicated region
  $region38: #{eye_state_lstm_128.1} parent=0 // pred_check
    _
  $region39: #{eye_state_lstm_128.1} parent=0 // pred_check_branch
    %2007 = sbr.rel (0) target = $region41
  $region40: #{eye_state_lstm_128.1} parent=0 // pred_region
    _
  $region41: #{eye_state_lstm_128.1} parent=0 // pred_fallthru
    _

</llo_original>
